<compile_context>
chip_gen: v5e
topology: v5e:2x2
jax: 0.10.0
libtpu: 0.0.40
codegen_flags: <defaults>
</compile_context>

<pallas_src>
import functools

import jax
import jax.numpy as jnp
from jax.experimental import pallas as pl
from jax.experimental.pallas import tpu as pltpu

BASE = 128
NODE_NUM = 192
IN_DIM = BASE + BASE + 2          # 258
IN_MAIN = 256                     # MXU-aligned slice of the input
IN_TAIL = IN_DIM - IN_MAIN        # 2 leftover features -> rank-2 VPU update
N_HIDDEN = 8                      # fc2..fc9
N_LAYERS = 10                     # fc1..fc9 (+ReLU) and output (no ReLU)


def _round_up(x, m):
    return (x + m - 1) // m * m


# --------------------------------------------------------------------------- #
# Kernel
# --------------------------------------------------------------------------- #
def mlp_kernel(x_ref, w1m_ref, w1t_ref, wh_ref, wo_ref, b_ref, out_ref):
    b = b_ref[...]                                        # (10, 192) f32

    # ---- fc1: 256-wide bf16 MXU matmul + rank-2 f32 VPU update -------------
    x_main = x_ref[:, :IN_MAIN].astype(jnp.bfloat16)      # cast on VPU (slack)
    h = jnp.dot(x_main, w1m_ref[...],
                preferred_element_type=jnp.float32)       # (tile, 192) f32
    xt = x_ref[:, IN_MAIN:]                               # (tile, 2)  f32
    w1t = w1t_ref[...]                                    # (2, 192)   f32
    h = h + xt[:, 0:1] * w1t[0:1, :] + xt[:, 1:2] * w1t[1:2, :]
    h = jnp.maximum(h + b[0], 0.0)

    # ---- fc2 .. fc9 (unrolled: full LLO scheduler visibility) --------------
    for i in range(N_HIDDEN):
        h = jnp.dot(h.astype(jnp.bfloat16), wh_ref[i],
                    preferred_element_type=jnp.float32)
        h = jnp.maximum(h + b[i + 1], 0.0)

    # ---- output layer (no ReLU) ---------------------------------------------
    h = jnp.dot(h.astype(jnp.bfloat16), wo_ref[...],
                preferred_element_type=jnp.float32)
    out_ref[...] = h + b[N_LAYERS - 1, :BASE]


# --------------------------------------------------------------------------- #
# Generation-aware tiling / VMEM budget
# --------------------------------------------------------------------------- #
def _hw_config():
    """Returns (max_batch_tile, vmem_cap_bytes) from the TPU generation."""
    try:
        kind = jax.devices()[0].device_kind.lower()
    except Exception:  # pragma: no cover - defensive
        kind = ""
    # v4/v5e/v5p/v6e: 128 MiB VMEM -> big tiles, ~100 MiB budget.
    # v7x (64 MiB physical per TC) or unknown: conservative.
    if any(tag in kind for tag in ("v4", "v5", "v6")):
        return 8192, 100 << 20
    return 4096, 50 << 20


def _choose_batch_tile(B, max_tile):
    if B < 256:
        # Latency-bound tiny batches: one sublane/bf16-aligned tile.
        return _round_up(max(B, 16), 16)
    # >=2 steps so both v7x TensorCores get work; even step count keeps the
    # megacore split balanced; no padding floor (old 512 floor wasted up to
    # ~45% of the grid just above a tile boundary).
    n_steps = max(2, pl.cdiv(B, max_tile))
    n_steps += n_steps & 1
    tile = _round_up(pl.cdiv(B, n_steps), 16)
    # Opportunistic 256-row alignment (clean MXU M passes / unmasked stores)
    # only when the extra zero-padded rows stay negligible.
    tile256 = _round_up(tile, 256)
    if tile256 * n_steps - B <= max(B // 32, 32):
        tile = tile256
    return tile


def _vmem_limit_bytes(tile, cap):
    # x block f32 (tile, 258) lane-pads to 384; double-buffered.
    x_blk = tile * 384 * 4
    out_blk = tile * BASE * 4
    # Live f32/bf16 intermediates inside the fused layer chain (~3 KiB/row).
    act = tile * 256 * 4 * 3
    # Resident weights + biases (double-buffer allocation, generous).
    w = 3 << 20
    total = 2 * (x_blk + out_blk) + act + w + (8 << 20)   # + Mosaic scratch slack
    return int(min(cap, max(32 << 20, total)))


# --------------------------------------------------------------------------- #
# Parameter packing + forward wrapper
# --------------------------------------------------------------------------- #
def pack_params(params):
    """params = [(w, b)] * 10 with w stored as (in_features, out_features)."""
    w1, _ = params[0]
    w1_main = w1[:IN_MAIN].astype(jnp.bfloat16)                 # (256, 192)
    w1_tail = w1[IN_MAIN:].astype(jnp.float32)                  # (2, 192)
    w_hidden = jnp.stack(
        [params[i][0] for i in range(1, 1 + N_HIDDEN)]).astype(jnp.bfloat16)
    w_out = params[-1][0].astype(jnp.bfloat16)                  # (192, 128)
    biases = jnp.zeros((N_LAYERS, NODE_NUM), jnp.float32)       # (10, 192)
    for i, (_, bvec) in enumerate(params):
        biases = biases.at[i, :bvec.shape[0]].set(bvec.astype(jnp.float32))
    return (w1_main, w1_tail, w_hidden, w_out, biases)


@functools.partial(jax.jit, static_argnames=("batch_tile",))
def mlp_forward(x, packed, *, batch_tile=None):
    w1_main, w1_tail, w_hidden, w_out, biases = packed
    B = x.shape[0]
    max_tile, vmem_cap = _hw_config()
    tile = batch_tile if batch_tile is not None else _choose_batch_tile(B, max_tile)
    n_steps = pl.cdiv(B, tile)
    B_pad = n_steps * tile

    x = x.astype(jnp.float32)
    if B_pad != B:                      # ragged batch -> zero-pad, slice later
        x = jnp.pad(x, ((0, B_pad - B), (0, 0)))

    in_specs = [
        # Single f32 input block; 258 == full last dim so the (8,128) rule is
        # satisfied, and the split/cast happens inside the kernel.
        pl.BlockSpec((tile, IN_DIM), lambda i: (i, 0)),
        # Constant-index weight/bias blocks: DMA'd once, resident across the
        # grid (Pallas skips the re-fetch when the block index is unchanged).
        pl.BlockSpec((IN_MAIN, NODE_NUM), lambda i: (0, 0)),        # w1_main
        pl.BlockSpec((IN_TAIL, NODE_NUM), lambda i: (0, 0)),        # w1_tail
        pl.BlockSpec((N_HIDDEN, NODE_NUM, NODE_NUM),
                     lambda i: (0, 0, 0)),                          # w_hidden
        pl.BlockSpec((NODE_NUM, BASE), lambda i: (0, 0)),           # w_out
        pl.BlockSpec((N_LAYERS, NODE_NUM), lambda i: (0, 0)),       # biases
    ]
    out_spec = pl.BlockSpec((tile, BASE), lambda i: (i, 0))

    out = pl.pallas_call(
        mlp_kernel,
        out_shape=jax.ShapeDtypeStruct((B_pad, BASE), jnp.float32),
        grid_spec=pltpu.PrefetchScalarGridSpec(
            num_scalar_prefetch=0,
            grid=(n_steps,),
            in_specs=in_specs,
            out_specs=out_spec,
        ),
        compiler_params=pltpu.CompilerParams(
            dimension_semantics=("parallel",),
            vmem_limit_bytes=_vmem_limit_bytes(tile, vmem_cap),
        ),
    )(x, w1_main, w1_tail, w_hidden, w_out, biases)
    return out[:B]


# --------------------------------------------------------------------------- #
# Reference + test harness
# --------------------------------------------------------------------------- #
def init_params(key):
    """torch.nn.Linear-style init (uniform(+-1/sqrt(fan_in))), w as (in, out)."""
    dims = [(IN_DIM, NODE_NUM)] + [(NODE_NUM, NODE_NUM)] * 8 + [(NODE_NUM, BASE)]
    params = []
    for fan_in, fan_out in dims:
        key, kw, kb = jax.random.split(key, 3)
        bound = 1.0 / (fan_in ** 0.5)
        w = jax.random.uniform(kw, (fan_in, fan_out), jnp.float32, -bound, bound)
        b = jax.random.uniform(kb, (fan_out,), jnp.float32, -bound, bound)
        params.append((w, b))
    return params


def reference_forward(x, params):
    h = x
    for i, (w, b) in enumerate(params):
        h = jnp.dot(h, w, precision=jax.lax.Precision.HIGHEST) + b
        if i < len(params) - 1:
            h = jnp.maximum(h, 0.0)
    return h


if __name__ == "__main__":
    key = jax.random.PRNGKey(0)
    kx, kp, kx2 = jax.random.split(key, 3)
    params = init_params(kp)
    packed = pack_params(params)

    # Small test at the module's native feature width: batch=8, 258 features.
    x = jax.random.normal(kx, (8, IN_DIM), jnp.float32)
    out = mlp_forward(x, packed)
    jax.block_until_ready(out)
    ref = reference_forward(x, params)
    assert out.shape == (8, BASE)
    # bf16 matmuls -> relaxed tolerance vs. the exact-f32 reference.
    assert jnp.allclose(out, ref, atol=5e-2, rtol=5e-2), float(
        jnp.max(jnp.abs(out - ref)))

    # Ragged multi-tile batch: 600 rows -> 2 "parallel" steps of 304 rows
    # (only 8 padded rows), exercising padding and the megacore path.
    x2 = jax.random.normal(kx2, (600, IN_DIM), jnp.float32)
    out2 = mlp_forward(x2, packed)
    jax.block_until_ready(out2)
    ref2 = reference_forward(x2, params)
    assert out2.shape == (600, BASE)
    assert jnp.allclose(out2, ref2, atol=5e-2, rtol=5e-2), float(
        jnp.max(jnp.abs(out2 - ref2)))

    print("KERNEL_OK")
</pallas_src>

<mosaic_0001>
module attributes {stable_mosaic.version = 11 : i64} {
  func.func @mlp_kernel(%arg0: i32, %arg1: memref<16x258xf32, #tpu.memory_space<vmem>>, %arg2: memref<256x192xbf16, #tpu.memory_space<vmem>>, %arg3: memref<2x192xf32, #tpu.memory_space<vmem>>, %arg4: memref<8x192x192xbf16, #tpu.memory_space<vmem>>, %arg5: memref<192x128xbf16, #tpu.memory_space<vmem>>, %arg6: memref<10x192xf32, #tpu.memory_space<vmem>>, %arg7: memref<16x128xf32, #tpu.memory_space<vmem>>) attributes {dimension_semantics = [#tpu.dimension_semantics<parallel>], iteration_bounds = array<i64: 1>, scalar_prefetch = 0 : i64, scratch_operands = 0 : i64, tpu.core_type = #tpu.core_type<tc>, window_params = [{transform_indices = @transform_0, window_bounds = array<i64: 16, 258>}, {pipeline_mode = #tpu.pipeline_mode<synchronous>, transform_indices = @transform_1, window_bounds = array<i64: 256, 192>}, {pipeline_mode = #tpu.pipeline_mode<synchronous>, transform_indices = @transform_2, window_bounds = array<i64: 2, 192>}, {pipeline_mode = #tpu.pipeline_mode<synchronous>, transform_indices = @transform_3, window_bounds = array<i64: 8, 192, 192>}, {pipeline_mode = #tpu.pipeline_mode<synchronous>, transform_indices = @transform_4, window_bounds = array<i64: 192, 128>}, {pipeline_mode = #tpu.pipeline_mode<synchronous>, transform_indices = @transform_5, window_bounds = array<i64: 10, 192>}, {transform_indices = @transform_6, window_bounds = array<i64: 16, 128>}]} {
    %c0 = arith.constant 0 : index
    %c0_0 = arith.constant 0 : index
    %0 = vector.load %arg6[%c0, %c0_0] : memref<10x192xf32, #tpu.memory_space<vmem>>, vector<10x192xf32>
    %c0_1 = arith.constant 0 : index
    %c0_2 = arith.constant 0 : index
    %1 = vector.load %arg1[%c0_1, %c0_2] : memref<16x258xf32, #tpu.memory_space<vmem>>, vector<16x256xf32>
    %2 = arith.truncf %1 : vector<16x256xf32> to vector<16x256xbf16>
    %c0_3 = arith.constant 0 : index
    %c0_4 = arith.constant 0 : index
    %3 = vector.load %arg2[%c0_3, %c0_4] : memref<256x192xbf16, #tpu.memory_space<vmem>>, vector<256x192xbf16>
    %cst = arith.constant dense<0.000000e+00> : vector<16x192xf32>
    %4 = tpu.matmul %2, %3, %cst {dimension_numbers = #tpu.dot_dimension_numbers<[1], [0], [0], [1], [0, 0, 1, 1], [], []>} : vector<16x256xbf16>, vector<256x192xbf16>, vector<16x192xf32> -> vector<16x192xf32>
    %c0_5 = arith.constant 0 : index
    %c256 = arith.constant 256 : index
    %5 = vector.load %arg1[%c0_5, %c256] : memref<16x258xf32, #tpu.memory_space<vmem>>, vector<16x2xf32>
    %c0_6 = arith.constant 0 : index
    %c0_7 = arith.constant 0 : index
    %6 = vector.load %arg3[%c0_6, %c0_7] : memref<2x192xf32, #tpu.memory_space<vmem>>, vector<2x192xf32>
    %7 = vector.extract_strided_slice %5 {offsets = [0, 0], sizes = [16, 1], strides = [1, 1]} : vector<16x2xf32> to vector<16x1xf32>
    %8 = vector.extract_strided_slice %6 {offsets = [0, 0], sizes = [1, 192], strides = [1, 1]} : vector<2x192xf32> to vector<1x192xf32>
    %9 = vector.broadcast %7 : vector<16x1xf32> to vector<16x192xf32>
    %10 = vector.broadcast %8 : vector<1x192xf32> to vector<16x192xf32>
    %11 = arith.mulf %9, %10 : vector<16x192xf32>
    %12 = arith.addf %4, %11 : vector<16x192xf32>
    %13 = vector.extract_strided_slice %5 {offsets = [0, 1], sizes = [16, 1], strides = [1, 1]} : vector<16x2xf32> to vector<16x1xf32>
    %14 = vector.extract_strided_slice %6 {offsets = [1, 0], sizes = [1, 192], strides = [1, 1]} : vector<2x192xf32> to vector<1x192xf32>
    %15 = vector.broadcast %13 : vector<16x1xf32> to vector<16x192xf32>
    %16 = vector.broadcast %14 : vector<1x192xf32> to vector<16x192xf32>
    %17 = arith.mulf %15, %16 : vector<16x192xf32>
    %18 = arith.addf %12, %17 : vector<16x192xf32>
    %19 = vector.extract_strided_slice %0 {offsets = [0, 0], sizes = [1, 192], strides = [1, 1]} : vector<10x192xf32> to vector<1x192xf32>
    %20 = vector.shape_cast %19 : vector<1x192xf32> to vector<192xf32>
    %21 = vector.shape_cast %20 : vector<192xf32> to vector<1x192xf32>
    %22 = vector.broadcast %21 : vector<1x192xf32> to vector<16x192xf32>
    %23 = arith.addf %18, %22 : vector<16x192xf32>
    %cst_8 = arith.constant 0.000000e+00 : f32
    %24 = vector.broadcast %cst_8 : f32 to vector<16x192xf32>
    %25 = arith.maximumf %23, %24 : vector<16x192xf32>
    %26 = arith.truncf %25 : vector<16x192xf32> to vector<16x192xbf16>
    %c0_9 = arith.constant 0 : index
    %c0_10 = arith.constant 0 : index
    %c0_11 = arith.constant 0 : index
    %27 = vector.load %arg4[%c0_9, %c0_10, %c0_11] : memref<8x192x192xbf16, #tpu.memory_space<vmem>>, vector<1x192x192xbf16>
    %28 = vector.shape_cast %27 : vector<1x192x192xbf16> to vector<192x192xbf16>
    %cst_12 = arith.constant dense<0.000000e+00> : vector<16x192xf32>
    %29 = tpu.matmul %26, %28, %cst_12 {dimension_numbers = #tpu.dot_dimension_numbers<[1], [0], [0], [1], [0, 0, 1, 1], [], []>} : vector<16x192xbf16>, vector<192x192xbf16>, vector<16x192xf32> -> vector<16x192xf32>
    %30 = vector.extract_strided_slice %0 {offsets = [1, 0], sizes = [1, 192], strides = [1, 1]} : vector<10x192xf32> to vector<1x192xf32>
    %31 = vector.shape_cast %30 : vector<1x192xf32> to vector<192xf32>
    %32 = vector.shape_cast %31 : vector<192xf32> to vector<1x192xf32>
    %33 = vector.broadcast %32 : vector<1x192xf32> to vector<16x192xf32>
    %34 = arith.addf %29, %33 : vector<16x192xf32>
    %cst_13 = arith.constant 0.000000e+00 : f32
    %35 = vector.broadcast %cst_13 : f32 to vector<16x192xf32>
    %36 = arith.maximumf %34, %35 : vector<16x192xf32>
    %37 = arith.truncf %36 : vector<16x192xf32> to vector<16x192xbf16>
    %c1 = arith.constant 1 : index
    %c0_14 = arith.constant 0 : index
    %c0_15 = arith.constant 0 : index
    %38 = vector.load %arg4[%c1, %c0_14, %c0_15] : memref<8x192x192xbf16, #tpu.memory_space<vmem>>, vector<1x192x192xbf16>
    %39 = vector.shape_cast %38 : vector<1x192x192xbf16> to vector<192x192xbf16>
    %cst_16 = arith.constant dense<0.000000e+00> : vector<16x192xf32>
    %40 = tpu.matmul %37, %39, %cst_16 {dimension_numbers = #tpu.dot_dimension_numbers<[1], [0], [0], [1], [0, 0, 1, 1], [], []>} : vector<16x192xbf16>, vector<192x192xbf16>, vector<16x192xf32> -> vector<16x192xf32>
    %41 = vector.extract_strided_slice %0 {offsets = [2, 0], sizes = [1, 192], strides = [1, 1]} : vector<10x192xf32> to vector<1x192xf32>
    %42 = vector.shape_cast %41 : vector<1x192xf32> to vector<192xf32>
    %43 = vector.shape_cast %42 : vector<192xf32> to vector<1x192xf32>
    %44 = vector.broadcast %43 : vector<1x192xf32> to vector<16x192xf32>
    %45 = arith.addf %40, %44 : vector<16x192xf32>
    %cst_17 = arith.constant 0.000000e+00 : f32
    %46 = vector.broadcast %cst_17 : f32 to vector<16x192xf32>
    %47 = arith.maximumf %45, %46 : vector<16x192xf32>
    %48 = arith.truncf %47 : vector<16x192xf32> to vector<16x192xbf16>
    %c2 = arith.constant 2 : index
    %c0_18 = arith.constant 0 : index
    %c0_19 = arith.constant 0 : index
    %49 = vector.load %arg4[%c2, %c0_18, %c0_19] : memref<8x192x192xbf16, #tpu.memory_space<vmem>>, vector<1x192x192xbf16>
    %50 = vector.shape_cast %49 : vector<1x192x192xbf16> to vector<192x192xbf16>
    %cst_20 = arith.constant dense<0.000000e+00> : vector<16x192xf32>
    %51 = tpu.matmul %48, %50, %cst_20 {dimension_numbers = #tpu.dot_dimension_numbers<[1], [0], [0], [1], [0, 0, 1, 1], [], []>} : vector<16x192xbf16>, vector<192x192xbf16>, vector<16x192xf32> -> vector<16x192xf32>
    %52 = vector.extract_strided_slice %0 {offsets = [3, 0], sizes = [1, 192], strides = [1, 1]} : vector<10x192xf32> to vector<1x192xf32>
    %53 = vector.shape_cast %52 : vector<1x192xf32> to vector<192xf32>
    %54 = vector.shape_cast %53 : vector<192xf32> to vector<1x192xf32>
    %55 = vector.broadcast %54 : vector<1x192xf32> to vector<16x192xf32>
    %56 = arith.addf %51, %55 : vector<16x192xf32>
    %cst_21 = arith.constant 0.000000e+00 : f32
    %57 = vector.broadcast %cst_21 : f32 to vector<16x192xf32>
    %58 = arith.maximumf %56, %57 : vector<16x192xf32>
    %59 = arith.truncf %58 : vector<16x192xf32> to vector<16x192xbf16>
    %c3 = arith.constant 3 : index
    %c0_22 = arith.constant 0 : index
    %c0_23 = arith.constant 0 : index
    %60 = vector.load %arg4[%c3, %c0_22, %c0_23] : memref<8x192x192xbf16, #tpu.memory_space<vmem>>, vector<1x192x192xbf16>
    %61 = vector.shape_cast %60 : vector<1x192x192xbf16> to vector<192x192xbf16>
    %cst_24 = arith.constant dense<0.000000e+00> : vector<16x192xf32>
    %62 = tpu.matmul %59, %61, %cst_24 {dimension_numbers = #tpu.dot_dimension_numbers<[1], [0], [0], [1], [0, 0, 1, 1], [], []>} : vector<16x192xbf16>, vector<192x192xbf16>, vector<16x192xf32> -> vector<16x192xf32>
    %63 = vector.extract_strided_slice %0 {offsets = [4, 0], sizes = [1, 192], strides = [1, 1]} : vector<10x192xf32> to vector<1x192xf32>
    %64 = vector.shape_cast %63 : vector<1x192xf32> to vector<192xf32>
    %65 = vector.shape_cast %64 : vector<192xf32> to vector<1x192xf32>
    %66 = vector.broadcast %65 : vector<1x192xf32> to vector<16x192xf32>
    %67 = arith.addf %62, %66 : vector<16x192xf32>
    %cst_25 = arith.constant 0.000000e+00 : f32
    %68 = vector.broadcast %cst_25 : f32 to vector<16x192xf32>
    %69 = arith.maximumf %67, %68 : vector<16x192xf32>
    %70 = arith.truncf %69 : vector<16x192xf32> to vector<16x192xbf16>
    %c4 = arith.constant 4 : index
    %c0_26 = arith.constant 0 : index
    %c0_27 = arith.constant 0 : index
    %71 = vector.load %arg4[%c4, %c0_26, %c0_27] : memref<8x192x192xbf16, #tpu.memory_space<vmem>>, vector<1x192x192xbf16>
    %72 = vector.shape_cast %71 : vector<1x192x192xbf16> to vector<192x192xbf16>
    %cst_28 = arith.constant dense<0.000000e+00> : vector<16x192xf32>
    %73 = tpu.matmul %70, %72, %cst_28 {dimension_numbers = #tpu.dot_dimension_numbers<[1], [0], [0], [1], [0, 0, 1, 1], [], []>} : vector<16x192xbf16>, vector<192x192xbf16>, vector<16x192xf32> -> vector<16x192xf32>
    %74 = vector.extract_strided_slice %0 {offsets = [5, 0], sizes = [1, 192], strides = [1, 1]} : vector<10x192xf32> to vector<1x192xf32>
    %75 = vector.shape_cast %74 : vector<1x192xf32> to vector<192xf32>
    %76 = vector.shape_cast %75 : vector<192xf32> to vector<1x192xf32>
    %77 = vector.broadcast %76 : vector<1x192xf32> to vector<16x192xf32>
    %78 = arith.addf %73, %77 : vector<16x192xf32>
    %cst_29 = arith.constant 0.000000e+00 : f32
    %79 = vector.broadcast %cst_29 : f32 to vector<16x192xf32>
    %80 = arith.maximumf %78, %79 : vector<16x192xf32>
    %81 = arith.truncf %80 : vector<16x192xf32> to vector<16x192xbf16>
    %c5 = arith.constant 5 : index
    %c0_30 = arith.constant 0 : index
    %c0_31 = arith.constant 0 : index
    %82 = vector.load %arg4[%c5, %c0_30, %c0_31] : memref<8x192x192xbf16, #tpu.memory_space<vmem>>, vector<1x192x192xbf16>
    %83 = vector.shape_cast %82 : vector<1x192x192xbf16> to vector<192x192xbf16>
    %cst_32 = arith.constant dense<0.000000e+00> : vector<16x192xf32>
    %84 = tpu.matmul %81, %83, %cst_32 {dimension_numbers = #tpu.dot_dimension_numbers<[1], [0], [0], [1], [0, 0, 1, 1], [], []>} : vector<16x192xbf16>, vector<192x192xbf16>, vector<16x192xf32> -> vector<16x192xf32>
    %85 = vector.extract_strided_slice %0 {offsets = [6, 0], sizes = [1, 192], strides = [1, 1]} : vector<10x192xf32> to vector<1x192xf32>
    %86 = vector.shape_cast %85 : vector<1x192xf32> to vector<192xf32>
    %87 = vector.shape_cast %86 : vector<192xf32> to vector<1x192xf32>
    %88 = vector.broadcast %87 : vector<1x192xf32> to vector<16x192xf32>
    %89 = arith.addf %84, %88 : vector<16x192xf32>
    %cst_33 = arith.constant 0.000000e+00 : f32
    %90 = vector.broadcast %cst_33 : f32 to vector<16x192xf32>
    %91 = arith.maximumf %89, %90 : vector<16x192xf32>
    %92 = arith.truncf %91 : vector<16x192xf32> to vector<16x192xbf16>
    %c6 = arith.constant 6 : index
    %c0_34 = arith.constant 0 : index
    %c0_35 = arith.constant 0 : index
    %93 = vector.load %arg4[%c6, %c0_34, %c0_35] : memref<8x192x192xbf16, #tpu.memory_space<vmem>>, vector<1x192x192xbf16>
    %94 = vector.shape_cast %93 : vector<1x192x192xbf16> to vector<192x192xbf16>
    %cst_36 = arith.constant dense<0.000000e+00> : vector<16x192xf32>
    %95 = tpu.matmul %92, %94, %cst_36 {dimension_numbers = #tpu.dot_dimension_numbers<[1], [0], [0], [1], [0, 0, 1, 1], [], []>} : vector<16x192xbf16>, vector<192x192xbf16>, vector<16x192xf32> -> vector<16x192xf32>
    %96 = vector.extract_strided_slice %0 {offsets = [7, 0], sizes = [1, 192], strides = [1, 1]} : vector<10x192xf32> to vector<1x192xf32>
    %97 = vector.shape_cast %96 : vector<1x192xf32> to vector<192xf32>
    %98 = vector.shape_cast %97 : vector<192xf32> to vector<1x192xf32>
    %99 = vector.broadcast %98 : vector<1x192xf32> to vector<16x192xf32>
    %100 = arith.addf %95, %99 : vector<16x192xf32>
    %cst_37 = arith.constant 0.000000e+00 : f32
    %101 = vector.broadcast %cst_37 : f32 to vector<16x192xf32>
    %102 = arith.maximumf %100, %101 : vector<16x192xf32>
    %103 = arith.truncf %102 : vector<16x192xf32> to vector<16x192xbf16>
    %c7 = arith.constant 7 : index
    %c0_38 = arith.constant 0 : index
    %c0_39 = arith.constant 0 : index
    %104 = vector.load %arg4[%c7, %c0_38, %c0_39] : memref<8x192x192xbf16, #tpu.memory_space<vmem>>, vector<1x192x192xbf16>
    %105 = vector.shape_cast %104 : vector<1x192x192xbf16> to vector<192x192xbf16>
    %cst_40 = arith.constant dense<0.000000e+00> : vector<16x192xf32>
    %106 = tpu.matmul %103, %105, %cst_40 {dimension_numbers = #tpu.dot_dimension_numbers<[1], [0], [0], [1], [0, 0, 1, 1], [], []>} : vector<16x192xbf16>, vector<192x192xbf16>, vector<16x192xf32> -> vector<16x192xf32>
    %107 = vector.extract_strided_slice %0 {offsets = [8, 0], sizes = [1, 192], strides = [1, 1]} : vector<10x192xf32> to vector<1x192xf32>
    %108 = vector.shape_cast %107 : vector<1x192xf32> to vector<192xf32>
    %109 = vector.shape_cast %108 : vector<192xf32> to vector<1x192xf32>
    %110 = vector.broadcast %109 : vector<1x192xf32> to vector<16x192xf32>
    %111 = arith.addf %106, %110 : vector<16x192xf32>
    %cst_41 = arith.constant 0.000000e+00 : f32
    %112 = vector.broadcast %cst_41 : f32 to vector<16x192xf32>
    %113 = arith.maximumf %111, %112 : vector<16x192xf32>
    %114 = arith.truncf %113 : vector<16x192xf32> to vector<16x192xbf16>
    %c0_42 = arith.constant 0 : index
    %c0_43 = arith.constant 0 : index
    %115 = vector.load %arg5[%c0_42, %c0_43] : memref<192x128xbf16, #tpu.memory_space<vmem>>, vector<192x128xbf16>
    %cst_44 = arith.constant dense<0.000000e+00> : vector<16x128xf32>
    %116 = tpu.matmul %114, %115, %cst_44 {dimension_numbers = #tpu.dot_dimension_numbers<[1], [0], [0], [1], [0, 0, 1, 1], [], []>} : vector<16x192xbf16>, vector<192x128xbf16>, vector<16x128xf32> -> vector<16x128xf32>
    %117 = vector.extract_strided_slice %0 {offsets = [9, 0], sizes = [1, 128], strides = [1, 1]} : vector<10x192xf32> to vector<1x128xf32>
    %118 = vector.shape_cast %117 : vector<1x128xf32> to vector<128xf32>
    %119 = vector.shape_cast %118 : vector<128xf32> to vector<1x128xf32>
    %120 = vector.broadcast %119 : vector<1x128xf32> to vector<16x128xf32>
    %121 = arith.addf %116, %120 : vector<16x128xf32>
    %c0_45 = arith.constant 0 : index
    %c0_46 = arith.constant 0 : index
    %122 = vector.load %arg7[%c0_45, %c0_46] : memref<16x128xf32, #tpu.memory_space<vmem>>, vector<16x128xf32>
    tpu.vector_store %arg7[%c0_45, %c0_46], %121 {strides = array<i32>} : memref<16x128xf32, #tpu.memory_space<vmem>>, vector<16x128xf32>,
    return
  }
  func.func @transform_0(%arg0: i32) -> (i32, i32) {
    %c0_i32 = arith.constant 0 : i32
    %c0_i32_0 = arith.constant 0 : i32
    return %arg0, %c0_i32 : i32, i32
  }
  func.func @transform_1(%arg0: i32) -> (i32, i32) {
    %c0_i32 = arith.constant 0 : i32
    %c0_i32_0 = arith.constant 0 : i32
    %c0_i32_1 = arith.constant 0 : i32
    return %c0_i32, %c0_i32_0 : i32, i32
  }
  func.func @transform_2(%arg0: i32) -> (i32, i32) {
    %c0_i32 = arith.constant 0 : i32
    %c0_i32_0 = arith.constant 0 : i32
    %c0_i32_1 = arith.constant 0 : i32
    return %c0_i32, %c0_i32_0 : i32, i32
  }
  func.func @transform_3(%arg0: i32) -> (i32, i32, i32) {
    %c0_i32 = arith.constant 0 : i32
    %c0_i32_0 = arith.constant 0 : i32
    %c0_i32_1 = arith.constant 0 : i32
    %c0_i32_2 = arith.constant 0 : i32
    return %c0_i32, %c0_i32_0, %c0_i32_1 : i32, i32, i32
  }
  func.func @transform_4(%arg0: i32) -> (i32, i32) {
    %c0_i32 = arith.constant 0 : i32
    %c0_i32_0 = arith.constant 0 : i32
    %c0_i32_1 = arith.constant 0 : i32
    return %c0_i32, %c0_i32_0 : i32, i32
  }
  func.func @transform_5(%arg0: i32) -> (i32, i32) {
    %c0_i32 = arith.constant 0 : i32
    %c0_i32_0 = arith.constant 0 : i32
    %c0_i32_1 = arith.constant 0 : i32
    return %c0_i32, %c0_i32_0 : i32, i32
  }
  func.func @transform_6(%arg0: i32) -> (i32, i32) {
    %c0_i32 = arith.constant 0 : i32
    %c0_i32_0 = arith.constant 0 : i32
    return %arg0, %c0_i32 : i32, i32
  }
}

</mosaic_0001>

<llo_original>
// kernel: mlp_forward.1
$region0: #{mlp_forward.1}
  #allocation0 [shape = 'u32[]', space=smem, size = 0x4, offset = 0x4, fixed_abs, tag = 'smem constant byte address 0x4 - core index']
  #allocation1 [shape = 'u32[72,128]{1,0:T(1,128)}', space=vmem, size = 0x9000, scoped, tag = 'internal scratch']
  %s0 = inlined_call_operand.vmem [shape: f32[16,258], index: 0, kind: input, shape index: {}]
  %s1 = inlined_call_operand.vmem [shape: bf16[256,192], index: 1, kind: input, shape index: {}]
  %s2 = inlined_call_operand.vmem [shape: f32[2,192], index: 2, kind: input, shape index: {}]
  %s3 = inlined_call_operand.hbm [shape: bf16[8,192,192], index: 3, kind: input, shape index: {}]
  %s4 = inlined_call_operand.vmem [shape: bf16[192,128], index: 4, kind: input, shape index: {}]
  %s5 = inlined_call_operand.vmem [shape: f32[10,192], index: 5, kind: input, shape index: {}]
  %s6 = inlined_call_operand.vmem [shape: f32[16,128], index: 6, kind: output, shape index: {}]
  %s7 = sld [smem:[#allocation0]]
  $region38: #{mlp_forward.1} parent=0
    _
  %s9 = ssub.s32 1, %s7
  %s10 = scalar_select 0, %s9, %s7
  $region1: #{mlp_forward.1} parent=0
    #allocation2 [shape = 'u8[786432]{0}', space=vmem, size = 0xc0000, scoped, tag = 'input window, operand 3, single buffered']
    #allocation3 [shape = 's32[1]{0}', space=sflag, size = 0x4, scoped, tag = 'scoped memory for mlp_forward.1']
    %11 = vsyncpa [#allocation3], 0
    // Predicated region
    $region2: #{mlp_forward.1} parent=1 // pred_check
      _
    $region3: #{mlp_forward.1} parent=1 // pred_check_branch
      %13 = sbr.rel (0) target = $region5
    $region4: #{mlp_forward.1} parent=1 // pred_region
      _
    $region5: #{mlp_forward.1} parent=1 // pred_fallthru
      _
    // Predicated region
    $region6: #{mlp_forward.1} parent=1 // pred_check
      _
    $region7: #{mlp_forward.1} parent=1 // pred_check_branch
      %15 = sbr.rel (0) target = $region9
    $region8: #{mlp_forward.1} parent=1 // pred_region
      _
    $region9: #{mlp_forward.1} parent=1 // pred_fallthru
      _
    // Predicated region
    $region10: #{mlp_forward.1} parent=1 // pred_check
      _
    $region11: #{mlp_forward.1} parent=1 // pred_check_branch
      %17 = sbr.rel (0) target = $region13
    $region12: #{mlp_forward.1} parent=1 // pred_region
      _
    $region13: #{mlp_forward.1} parent=1 // pred_fallthru
      _
    // Predicated region
    $region14: #{mlp_forward.1} parent=1 // pred_check
      _
    $region15: #{mlp_forward.1} parent=1 // pred_check_branch
      %19 = sbr.rel (0) target = $region17
    $region16: #{mlp_forward.1} parent=1 // pred_region
      %21 = vsyncadd [#allocation3], 0
      %s22 = sshll.u32 %s3, 4
      %s23 = int_to_ptr.hbm [resolvable:$true] %s22
      %s24 = sshll.u32 [#allocation2], 4
      %s25 = int_to_ptr.vmem [resolvable:$true] %s24
      %30 = dma.hbm_to_vmem [thread:$0]  %s23, 24576, %s25, [#allocation3], 128, 128, 8
    $region17: #{mlp_forward.1} parent=1 // pred_fallthru
      _
    // Predicated region
    $region18: #{mlp_forward.1} parent=1 // pred_check
      _
    $region19: #{mlp_forward.1} parent=1 // pred_check_branch
      %32 = sbr.rel (0) target = $region21
    $region20: #{mlp_forward.1} parent=1 // pred_region
      _
    $region21: #{mlp_forward.1} parent=1 // pred_fallthru
      _
    // Predicated region
    $region22: #{mlp_forward.1} parent=1 // pred_check
      _
    $region23: #{mlp_forward.1} parent=1 // pred_check_branch
      %34 = sbr.rel (0) target = $region25
    $region24: #{mlp_forward.1} parent=1 // pred_region
      _
    $region25: #{mlp_forward.1} parent=1 // pred_fallthru
      _
    // Predicated region
    $region26: #{mlp_forward.1} parent=1 // pred_check
      _
    $region27: #{mlp_forward.1} parent=1 // pred_check_branch
      %36 = sbr.rel (0) target = $region29
    $region28: #{mlp_forward.1} parent=1 // pred_region
      %38 = dma.done [#allocation3], 24576
    $region29: #{mlp_forward.1} parent=1 // pred_fallthru
      _
    %v40 = vld [vmem:[%s5] sm:$0xff]
    %v41 = vld [vmem:[%s5 + $0x8] sm:$0xff]
    %v42 = vld [vmem:[%s5 + $0x10] sm:$0x3]
    %v43 = vld [vmem:[%s5 + $0x18] sm:$0x3]
    %v44 = vld [vmem:[%s0] sm:$0xff]
    %v45 = vld [vmem:[%s0 + $0x8] sm:$0xff]
    %v46 = vld [vmem:[%s0 + $0x18] sm:$0xff]
    %v47 = vld [vmem:[%s0 + $0x20] sm:$0xff]
    %v48 = vpack.c.bf16 %v46, %v44
    %v49 = vpack.c.bf16 %v47, %v45
    %v50 = vld [vmem:[%s1] sm:$0xff]
    %v51 = vld [vmem:[%s1 + $0x8] sm:$0xff]
    %v52 = vld [vmem:[%s1 + $0x10] sm:$0xff]
    %v53 = vld [vmem:[%s1 + $0x18] sm:$0xff]
    %v54 = vld [vmem:[%s1 + $0x20] sm:$0xff]
    %v55 = vld [vmem:[%s1 + $0x28] sm:$0xff]
    %v56 = vld [vmem:[%s1 + $0x30] sm:$0xff]
    %v57 = vld [vmem:[%s1 + $0x38] sm:$0xff]
    %v58 = vld [vmem:[%s1 + $0x40] sm:$0xff]
    %v59 = vld [vmem:[%s1 + $0x48] sm:$0xff]
    %v60 = vld [vmem:[%s1 + $0x50] sm:$0xff]
    %v61 = vld [vmem:[%s1 + $0x58] sm:$0xff]
    %v62 = vld [vmem:[%s1 + $0x60] sm:$0xff]
    %v63 = vld [vmem:[%s1 + $0x68] sm:$0xff]
    %v64 = vld [vmem:[%s1 + $0x70] sm:$0xff]
    %v65 = vld [vmem:[%s1 + $0x78] sm:$0xff]
    %v66 = vld [vmem:[%s1 + $0x80] sm:$0xff]
    %v67 = vld [vmem:[%s1 + $0x88] sm:$0xff]
    %v68 = vld [vmem:[%s1 + $0x90] sm:$0xff]
    %v69 = vld [vmem:[%s1 + $0x98] sm:$0xff]
    %v70 = vld [vmem:[%s1 + $0xa0] sm:$0xff]
    %v71 = vld [vmem:[%s1 + $0xa8] sm:$0xff]
    %v72 = vld [vmem:[%s1 + $0xb0] sm:$0xff]
    %v73 = vld [vmem:[%s1 + $0xb8] sm:$0xff]
    %v74 = vld [vmem:[%s1 + $0xc0] sm:$0xff]
    %v75 = vld [vmem:[%s1 + $0xc8] sm:$0xff]
    %v76 = vld [vmem:[%s1 + $0xd0] sm:$0xff]
    %v77 = vld [vmem:[%s1 + $0xd8] sm:$0xff]
    %v78 = vld [vmem:[%s1 + $0xe0] sm:$0xff]
    %v79 = vld [vmem:[%s1 + $0xe8] sm:$0xff]
    %v80 = vld [vmem:[%s1 + $0xf0] sm:$0xff]
    %v81 = vld [vmem:[%s1 + $0xf8] sm:$0xff]
    %v82 = vld [vmem:[%s0 + $0x10] sm:$0xff]
    %v83 = vld [vmem:[%s0 + $0x28] sm:$0xff]
    %v84 = vld [vmem:[%s2] sm:$0xf]
    %86 = vset.pattern.permute.xlu0 0
    %87 = vperm.xlu0 %86, %v82
    %v88 = vpop.permute.xlu0 %87
    %91 = vset.pattern.permute.xlu0 0
    %92 = vperm.xlu0 %91, %v83
    %v93 = vpop.permute.xlu0 %92
    %v96 = vperm.slane %v84, 0
    %v97 = vperm.slane %v84, 2
    %v100 = vperm.slane %v96, 0
    %v101 = vperm.slane %v97, 0
    %v102 = vmul.f32 %v88, %v100
    %v103 = vmul.f32 %v88, %v101
    %v104 = vmul.f32 %v93, %v100
    %v105 = vmul.f32 %v93, %v101
    %v138 = vunpack.c.l.b16 %v50
    %v139 = vunpack.c.h.b16 %v50
    %v140 = vunpack.c.l.b16 %v51
    %v141 = vunpack.c.h.b16 %v51
    %v142 = vunpack.c.l.b16 %v52
    %v143 = vunpack.c.h.b16 %v52
    %v144 = vunpack.c.l.b16 %v53
    %v145 = vunpack.c.h.b16 %v53
    %v146 = vunpack.c.l.b16 %v54
    %v147 = vunpack.c.h.b16 %v54
    %v148 = vunpack.c.l.b16 %v55
    %v149 = vunpack.c.h.b16 %v55
    %v150 = vunpack.c.l.b16 %v56
    %v151 = vunpack.c.h.b16 %v56
    %v152 = vunpack.c.l.b16 %v57
    %v153 = vunpack.c.h.b16 %v57
    %v154 = vunpack.c.l.b16 %v58
    %v155 = vunpack.c.h.b16 %v58
    %v156 = vunpack.c.l.b16 %v59
    %v157 = vunpack.c.h.b16 %v59
    %v158 = vunpack.c.l.b16 %v60
    %v159 = vunpack.c.h.b16 %v60
    %v160 = vunpack.c.l.b16 %v61
    %v161 = vunpack.c.h.b16 %v61
    %v162 = vunpack.c.l.b16 %v62
    %v163 = vunpack.c.h.b16 %v62
    %v164 = vunpack.c.l.b16 %v63
    %v165 = vunpack.c.h.b16 %v63
    %v166 = vunpack.c.l.b16 %v64
    %v167 = vunpack.c.h.b16 %v64
    %v168 = vunpack.c.l.b16 %v65
    %v169 = vunpack.c.h.b16 %v65
    %v170 = vunpack.c.l.b16 %v66
    %v171 = vunpack.c.h.b16 %v66
    %v172 = vunpack.c.l.b16 %v67
    %v173 = vunpack.c.h.b16 %v67
    %v174 = vunpack.c.l.b16 %v68
    %v175 = vunpack.c.h.b16 %v68
    %v176 = vunpack.c.l.b16 %v69
    %v177 = vunpack.c.h.b16 %v69
    %v178 = vunpack.c.l.b16 %v70
    %v179 = vunpack.c.h.b16 %v70
    %v180 = vunpack.c.l.b16 %v71
    %v181 = vunpack.c.h.b16 %v71
    %v182 = vunpack.c.l.b16 %v72
    %v183 = vunpack.c.h.b16 %v72
    %v184 = vunpack.c.l.b16 %v73
    %v185 = vunpack.c.h.b16 %v73
    %v186 = vunpack.c.l.b16 %v74
    %v187 = vunpack.c.h.b16 %v74
    %v188 = vunpack.c.l.b16 %v75
    %v189 = vunpack.c.h.b16 %v75
    %v190 = vunpack.c.l.b16 %v76
    %v191 = vunpack.c.h.b16 %v76
    %v192 = vunpack.c.l.b16 %v77
    %v193 = vunpack.c.h.b16 %v77
    %v194 = vunpack.c.l.b16 %v78
    %v195 = vunpack.c.h.b16 %v78
    %v196 = vunpack.c.l.b16 %v79
    %v197 = vunpack.c.h.b16 %v79
    %v198 = vunpack.c.l.b16 %v80
    %v199 = vunpack.c.h.b16 %v80
    %v200 = vunpack.c.l.b16 %v81
    %v201 = vunpack.c.h.b16 %v81
    %v202 = vpack.c.b16 %v140, %v138
    %v203 = vpack.c.b16 %v141, %v139
    %v204 = vpack.c.b16 %v144, %v142
    %v205 = vpack.c.b16 %v145, %v143
    %v206 = vpack.c.b16 %v148, %v146
    %v207 = vpack.c.b16 %v149, %v147
    %v208 = vpack.c.b16 %v152, %v150
    %v209 = vpack.c.b16 %v153, %v151
    %v210 = vpack.c.b16 %v156, %v154
    %v211 = vpack.c.b16 %v157, %v155
    %v212 = vpack.c.b16 %v160, %v158
    %v213 = vpack.c.b16 %v161, %v159
    %v214 = vpack.c.b16 %v164, %v162
    %v215 = vpack.c.b16 %v165, %v163
    %v216 = vpack.c.b16 %v168, %v166
    %v217 = vpack.c.b16 %v169, %v167
    %v218 = vpack.c.b16 %v172, %v170
    %v219 = vpack.c.b16 %v173, %v171
    %v220 = vpack.c.b16 %v176, %v174
    %v221 = vpack.c.b16 %v177, %v175
    %v222 = vpack.c.b16 %v180, %v178
    %v223 = vpack.c.b16 %v181, %v179
    %v224 = vpack.c.b16 %v184, %v182
    %v225 = vpack.c.b16 %v185, %v183
    %v226 = vpack.c.b16 %v188, %v186
    %v227 = vpack.c.b16 %v189, %v187
    %v228 = vpack.c.b16 %v192, %v190
    %v229 = vpack.c.b16 %v193, %v191
    %v230 = vpack.c.b16 %v196, %v194
    %v231 = vpack.c.b16 %v197, %v195
    %v232 = vpack.c.b16 %v200, %v198
    %v233 = vpack.c.b16 %v201, %v199
    %266 = vmatpush.bf16.msra.mxu0 %v216
    %267 = vmatpush.bf16.msra.mxu0 %v214
    %268 = vmatpush.bf16.msra.mxu0 %v212
    %269 = vmatpush.bf16.msra.mxu0 %v210
    %270 = vmatpush.bf16.msra.mxu0 %v208
    %271 = vmatpush.bf16.msra.mxu0 %v206
    %272 = vmatpush.bf16.msra.mxu0 %v204
    %273 = vmatpush.bf16.msra.mxu0 %v202
    %274 = vmatmul.bf16.gmra.mxu0 %v48
    %v275 = vpop.f32.mrf.mxu0
    %v276 = vadd.f32 %v102, %v275
    %v277 = vpop.f32.mrf.mxu0
    %v278 = vadd.f32 %v104, %v277
    %279 = vdwg.mxu0
    %280 = vmatpush.bf16.msra.mxu0 %v232
    %281 = vmatpush.bf16.msra.mxu0 %v230
    %282 = vmatpush.bf16.msra.mxu0 %v228
    %283 = vmatpush.bf16.msra.mxu0 %v226
    %284 = vmatpush.bf16.msra.mxu0 %v224
    %285 = vmatpush.bf16.msra.mxu0 %v222
    %286 = vmatpush.bf16.msra.mxu0 %v220
    %287 = vmatpush.bf16.msra.mxu0 %v218
    %288 = vmatmul.bf16.gmra.mxu0 %v49
    %v289 = vpop.f32.mrf.mxu0
    %v290 = vadd.f32 %v276, %v289
    %v291 = vpop.f32.mrf.mxu0
    %v292 = vadd.f32 %v278, %v291
    %293 = vdwg.mxu0
    %294 = vmatpush.bf16.msra.mxu0 %v217
    %295 = vmatpush.bf16.msra.mxu0 %v215
    %296 = vmatpush.bf16.msra.mxu0 %v213
    %297 = vmatpush.bf16.msra.mxu0 %v211
    %298 = vmatpush.bf16.msra.mxu0 %v209
    %299 = vmatpush.bf16.msra.mxu0 %v207
    %300 = vmatpush.bf16.msra.mxu0 %v205
    %301 = vmatpush.bf16.msra.mxu0 %v203
    %302 = vmatmul.bf16.gmra.mxu0 %v48
    %v303 = vpop.f32.mrf.mxu0
    %v304 = vadd.f32 %v103, %v303
    %v305 = vpop.f32.mrf.mxu0
    %v306 = vadd.f32 %v105, %v305
    %307 = vdwg.mxu0
    %308 = vmatpush.bf16.msra.mxu0 %v233
    %309 = vmatpush.bf16.msra.mxu0 %v231
    %310 = vmatpush.bf16.msra.mxu0 %v229
    %311 = vmatpush.bf16.msra.mxu0 %v227
    %312 = vmatpush.bf16.msra.mxu0 %v225
    %313 = vmatpush.bf16.msra.mxu0 %v223
    %314 = vmatpush.bf16.msra.mxu0 %v221
    %315 = vmatpush.bf16.msra.mxu0 %v219
    %316 = vmatmul.bf16.gmra.mxu0 %v49
    %v317 = vpop.f32.mrf.mxu0
    %v318 = vadd.f32 %v304, %v317
    %v319 = vpop.f32.mrf.mxu0
    %v320 = vadd.f32 %v306, %v319
    %321 = vdwg.mxu0
    %322 = vset.pattern.permute.xlu0 1
    %323 = vperm.xlu0 %322, %v82
    %v324 = vpop.permute.xlu0 %323
    %326 = vset.pattern.permute.xlu0 1
    %327 = vperm.xlu0 %326, %v83
    %v328 = vpop.permute.xlu0 %327
    %v330 = vperm.slane %v84, 1
    %v331 = vperm.slane %v84, 3
    %v334 = vperm.slane %v330, 1
    %v335 = vperm.slane %v331, 1
    %v336 = vmul.f32 %v324, %v334
    %v337 = vmul.f32 %v324, %v335
    %v338 = vmul.f32 %v328, %v334
    %v339 = vmul.f32 %v328, %v335
    %v340 = vadd.f32 %v290, %v336
    %v341 = vadd.f32 %v318, %v337
    %v342 = vadd.f32 %v292, %v338
    %v343 = vadd.f32 %v320, %v339
    %v344 = vperm.slane %v40, 0
    %v345 = vperm.slane %v41, 0
    %v346 = vadd.f32 %v340, %v344
    %v347 = vadd.f32 %v341, %v345
    %v348 = vadd.f32 %v342, %v344
    %v349 = vadd.f32 %v343, %v345
    %v350 = vmax.f32 %v346, 0.0
    %v351 = vmax.f32 %v347, 0.0
    %v352 = vmax.f32 %v348, 0.0
    %v353 = vmax.f32 %v349, 0.0
    %v354 = vpack.c.bf16 %v352, %v350
    %v355 = vpack.c.bf16 %v353, %v351
    %v356 = vld [vmem:[#allocation2] sm:$0xff]
    %v357 = vld [vmem:[#allocation2 + $0x8] sm:$0xff]
    %v358 = vld [vmem:[#allocation2 + $0x10] sm:$0xff]
    %v359 = vld [vmem:[#allocation2 + $0x18] sm:$0xff]
    %v360 = vld [vmem:[#allocation2 + $0x20] sm:$0xff]
    %v361 = vld [vmem:[#allocation2 + $0x28] sm:$0xff]
    %v362 = vld [vmem:[#allocation2 + $0x30] sm:$0xff]
    %v363 = vld [vmem:[#allocation2 + $0x38] sm:$0xff]
    %v364 = vld [vmem:[#allocation2 + $0x40] sm:$0xff]
    %v365 = vld [vmem:[#allocation2 + $0x48] sm:$0xff]
    %v366 = vld [vmem:[#allocation2 + $0x50] sm:$0xff]
    %v367 = vld [vmem:[#allocation2 + $0x58] sm:$0xff]
    %v368 = vld [vmem:[#allocation2 + $0x60] sm:$0xff]
    %v369 = vld [vmem:[#allocation2 + $0x68] sm:$0xff]
    %v370 = vld [vmem:[#allocation2 + $0x70] sm:$0xff]
    %v371 = vld [vmem:[#allocation2 + $0x78] sm:$0xff]
    %v372 = vld [vmem:[#allocation2 + $0x80] sm:$0xff]
    %v373 = vld [vmem:[#allocation2 + $0x88] sm:$0xff]
    %v374 = vld [vmem:[#allocation2 + $0x90] sm:$0xff]
    %v375 = vld [vmem:[#allocation2 + $0x98] sm:$0xff]
    %v376 = vld [vmem:[#allocation2 + $0xa0] sm:$0xff]
    %v377 = vld [vmem:[#allocation2 + $0xa8] sm:$0xff]
    %v378 = vld [vmem:[#allocation2 + $0xb0] sm:$0xff]
    %v379 = vld [vmem:[#allocation2 + $0xb8] sm:$0xff]
    %v380 = vperm.slane %v40, 1
    %v381 = vperm.slane %v41, 1
    %v406 = vunpack.c.l.b16 %v356
    %v407 = vunpack.c.h.b16 %v356
    %v408 = vunpack.c.l.b16 %v357
    %v409 = vunpack.c.h.b16 %v357
    %v410 = vunpack.c.l.b16 %v358
    %v411 = vunpack.c.h.b16 %v358
    %v412 = vunpack.c.l.b16 %v359
    %v413 = vunpack.c.h.b16 %v359
    %v414 = vunpack.c.l.b16 %v360
    %v415 = vunpack.c.h.b16 %v360
    %v416 = vunpack.c.l.b16 %v361
    %v417 = vunpack.c.h.b16 %v361
    %v418 = vunpack.c.l.b16 %v362
    %v419 = vunpack.c.h.b16 %v362
    %v420 = vunpack.c.l.b16 %v363
    %v421 = vunpack.c.h.b16 %v363
    %v422 = vunpack.c.l.b16 %v364
    %v423 = vunpack.c.h.b16 %v364
    %v424 = vunpack.c.l.b16 %v365
    %v425 = vunpack.c.h.b16 %v365
    %v426 = vunpack.c.l.b16 %v366
    %v427 = vunpack.c.h.b16 %v366
    %v428 = vunpack.c.l.b16 %v367
    %v429 = vunpack.c.h.b16 %v367
    %v430 = vunpack.c.l.b16 %v368
    %v431 = vunpack.c.h.b16 %v368
    %v432 = vunpack.c.l.b16 %v369
    %v433 = vunpack.c.h.b16 %v369
    %v434 = vunpack.c.l.b16 %v370
    %v435 = vunpack.c.h.b16 %v370
    %v436 = vunpack.c.l.b16 %v371
    %v437 = vunpack.c.h.b16 %v371
    %v438 = vunpack.c.l.b16 %v372
    %v439 = vunpack.c.h.b16 %v372
    %v440 = vunpack.c.l.b16 %v373
    %v441 = vunpack.c.h.b16 %v373
    %v442 = vunpack.c.l.b16 %v374
    %v443 = vunpack.c.h.b16 %v374
    %v444 = vunpack.c.l.b16 %v375
    %v445 = vunpack.c.h.b16 %v375
    %v446 = vunpack.c.l.b16 %v376
    %v447 = vunpack.c.h.b16 %v376
    %v448 = vunpack.c.l.b16 %v377
    %v449 = vunpack.c.h.b16 %v377
    %v450 = vunpack.c.l.b16 %v378
    %v451 = vunpack.c.h.b16 %v378
    %v452 = vunpack.c.l.b16 %v379
    %v453 = vunpack.c.h.b16 %v379
    %v454 = vpack.c.b16 %v408, %v406
    %v455 = vpack.c.b16 %v409, %v407
    %v456 = vpack.c.b16 %v412, %v410
    %v457 = vpack.c.b16 %v413, %v411
    %v458 = vpack.c.b16 %v416, %v414
    %v459 = vpack.c.b16 %v417, %v415
    %v460 = vpack.c.b16 %v420, %v418
    %v461 = vpack.c.b16 %v421, %v419
    %v462 = vpack.c.b16 %v424, %v422
    %v463 = vpack.c.b16 %v425, %v423
    %v464 = vpack.c.b16 %v428, %v426
    %v465 = vpack.c.b16 %v429, %v427
    %v466 = vpack.c.b16 %v432, %v430
    %v467 = vpack.c.b16 %v433, %v431
    %v468 = vpack.c.b16 %v436, %v434
    %v469 = vpack.c.b16 %v437, %v435
    %v470 = vpack.c.b16 %v440, %v438
    %v471 = vpack.c.b16 %v441, %v439
    %v472 = vpack.c.b16 %v444, %v442
    %v473 = vpack.c.b16 %v445, %v443
    %v474 = vpack.c.b16 %v448, %v446
    %v475 = vpack.c.b16 %v449, %v447
    %v476 = vpack.c.b16 %v452, %v450
    %v477 = vpack.c.b16 %v453, %v451
    %vm502 = vcmask 523264
    %v504 = vsel %vm502, %v355, 0
    %506 = vmatpush.bf16.msra.mxu0 %v468
    %507 = vmatpush.bf16.msra.mxu0 %v466
    %508 = vmatpush.bf16.msra.mxu0 %v464
    %509 = vmatpush.bf16.msra.mxu0 %v462
    %510 = vmatpush.bf16.msra.mxu0 %v460
    %511 = vmatpush.bf16.msra.mxu0 %v458
    %512 = vmatpush.bf16.msra.mxu0 %v456
    %513 = vmatpush.bf16.msra.mxu0 %v454
    %514 = vmatmul.bf16.gmra.mxu0 %v354
    %v515 = vpop.f32.mrf.mxu0
    %v516 = vadd.f32 %v380, %v515
    %v517 = vpop.f32.mrf.mxu0
    %v518 = vadd.f32 %v380, %v517
    %519 = vdwg.mxu0
    %520 = vmatpush.bf16.msra.mxu0 0
    %521 = vmatpush.bf16.msra.mxu0 0
    %522 = vmatpush.bf16.msra.mxu0 0
    %523 = vmatpush.bf16.msra.mxu0 0
    %524 = vmatpush.bf16.msra.mxu0 %v476
    %525 = vmatpush.bf16.msra.mxu0 %v474
    %526 = vmatpush.bf16.msra.mxu0 %v472
    %527 = vmatpush.bf16.msra.mxu0 %v470
    %528 = vmatmul.bf16.gmra.mxu0 %v504
    %v529 = vpop.f32.mrf.mxu0
    %v530 = vadd.f32 %v516, %v529
    %v531 = vpop.f32.mrf.mxu0
    %v532 = vadd.f32 %v518, %v531
    %533 = vdwg.mxu0
    %534 = vmatpush.bf16.msra.mxu0 %v469
    %535 = vmatpush.bf16.msra.mxu0 %v467
    %536 = vmatpush.bf16.msra.mxu0 %v465
    %537 = vmatpush.bf16.msra.mxu0 %v463
    %538 = vmatpush.bf16.msra.mxu0 %v461
    %539 = vmatpush.bf16.msra.mxu0 %v459
    %540 = vmatpush.bf16.msra.mxu0 %v457
    %541 = vmatpush.bf16.msra.mxu0 %v455
    %542 = vmatmul.bf16.gmra.mxu0 %v354
    %v543 = vpop.f32.mrf.mxu0
    %v544 = vadd.f32 %v381, %v543
    %v545 = vpop.f32.mrf.mxu0
    %v546 = vadd.f32 %v381, %v545
    %547 = vdwg.mxu0
    %548 = vmatpush.bf16.msra.mxu0 0
    %549 = vmatpush.bf16.msra.mxu0 0
    %550 = vmatpush.bf16.msra.mxu0 0
    %551 = vmatpush.bf16.msra.mxu0 0
    %552 = vmatpush.bf16.msra.mxu0 %v477
    %553 = vmatpush.bf16.msra.mxu0 %v475
    %554 = vmatpush.bf16.msra.mxu0 %v473
    %555 = vmatpush.bf16.msra.mxu0 %v471
    %556 = vmatmul.bf16.gmra.mxu0 %v504
    %v557 = vpop.f32.mrf.mxu0
    %v558 = vadd.f32 %v544, %v557
    %v559 = vpop.f32.mrf.mxu0
    %v560 = vadd.f32 %v546, %v559
    %561 = vdwg.mxu0
    %v562 = vmax.f32 %v530, 0.0
    %v563 = vmax.f32 %v558, 0.0
    %v564 = vmax.f32 %v532, 0.0
    %v565 = vmax.f32 %v560, 0.0
    %v566 = vpack.c.bf16 %v564, %v562
    %v567 = vpack.c.bf16 %v565, %v563
    %s568 = scalar_lea.vmem [#allocation2], 192
    %v569 = vld [vmem:[%s568] sm:$0xff]
    %v570 = vld [vmem:[%s568 + $0x8] sm:$0xff]
    %v571 = vld [vmem:[%s568 + $0x10] sm:$0xff]
    %v572 = vld [vmem:[%s568 + $0x18] sm:$0xff]
    %v573 = vld [vmem:[%s568 + $0x20] sm:$0xff]
    %v574 = vld [vmem:[%s568 + $0x28] sm:$0xff]
    %v575 = vld [vmem:[%s568 + $0x30] sm:$0xff]
    %v576 = vld [vmem:[%s568 + $0x38] sm:$0xff]
    %v577 = vld [vmem:[%s568 + $0x40] sm:$0xff]
    %v578 = vld [vmem:[%s568 + $0x48] sm:$0xff]
    %v579 = vld [vmem:[%s568 + $0x50] sm:$0xff]
    %v580 = vld [vmem:[%s568 + $0x58] sm:$0xff]
    %v581 = vld [vmem:[%s568 + $0x60] sm:$0xff]
    %v582 = vld [vmem:[%s568 + $0x68] sm:$0xff]
    %v583 = vld [vmem:[%s568 + $0x70] sm:$0xff]
    %v584 = vld [vmem:[%s568 + $0x78] sm:$0xff]
    %v585 = vld [vmem:[%s568 + $0x80] sm:$0xff]
    %v586 = vld [vmem:[%s568 + $0x88] sm:$0xff]
    %v587 = vld [vmem:[%s568 + $0x90] sm:$0xff]
    %v588 = vld [vmem:[%s568 + $0x98] sm:$0xff]
    %v589 = vld [vmem:[%s568 + $0xa0] sm:$0xff]
    %v590 = vld [vmem:[%s568 + $0xa8] sm:$0xff]
    %v591 = vld [vmem:[%s568 + $0xb0] sm:$0xff]
    %v592 = vld [vmem:[%s568 + $0xb8] sm:$0xff]
    %v593 = vperm.slane %v40, 2
    %v594 = vperm.slane %v41, 2
    %v619 = vunpack.c.l.b16 %v569
    %v620 = vunpack.c.h.b16 %v569
    %v621 = vunpack.c.l.b16 %v570
    %v622 = vunpack.c.h.b16 %v570
    %v623 = vunpack.c.l.b16 %v571
    %v624 = vunpack.c.h.b16 %v571
    %v625 = vunpack.c.l.b16 %v572
    %v626 = vunpack.c.h.b16 %v572
    %v627 = vunpack.c.l.b16 %v573
    %v628 = vunpack.c.h.b16 %v573
    %v629 = vunpack.c.l.b16 %v574
    %v630 = vunpack.c.h.b16 %v574
    %v631 = vunpack.c.l.b16 %v575
    %v632 = vunpack.c.h.b16 %v575
    %v633 = vunpack.c.l.b16 %v576
    %v634 = vunpack.c.h.b16 %v576
    %v635 = vunpack.c.l.b16 %v577
    %v636 = vunpack.c.h.b16 %v577
    %v637 = vunpack.c.l.b16 %v578
    %v638 = vunpack.c.h.b16 %v578
    %v639 = vunpack.c.l.b16 %v579
    %v640 = vunpack.c.h.b16 %v579
    %v641 = vunpack.c.l.b16 %v580
    %v642 = vunpack.c.h.b16 %v580
    %v643 = vunpack.c.l.b16 %v581
    %v644 = vunpack.c.h.b16 %v581
    %v645 = vunpack.c.l.b16 %v582
    %v646 = vunpack.c.h.b16 %v582
    %v647 = vunpack.c.l.b16 %v583
    %v648 = vunpack.c.h.b16 %v583
    %v649 = vunpack.c.l.b16 %v584
    %v650 = vunpack.c.h.b16 %v584
    %v651 = vunpack.c.l.b16 %v585
    %v652 = vunpack.c.h.b16 %v585
    %v653 = vunpack.c.l.b16 %v586
    %v654 = vunpack.c.h.b16 %v586
    %v655 = vunpack.c.l.b16 %v587
    %v656 = vunpack.c.h.b16 %v587
    %v657 = vunpack.c.l.b16 %v588
    %v658 = vunpack.c.h.b16 %v588
    %v659 = vunpack.c.l.b16 %v589
    %v660 = vunpack.c.h.b16 %v589
    %v661 = vunpack.c.l.b16 %v590
    %v662 = vunpack.c.h.b16 %v590
    %v663 = vunpack.c.l.b16 %v591
    %v664 = vunpack.c.h.b16 %v591
    %v665 = vunpack.c.l.b16 %v592
    %v666 = vunpack.c.h.b16 %v592
    %v667 = vpack.c.b16 %v621, %v619
    %v668 = vpack.c.b16 %v622, %v620
    %v669 = vpack.c.b16 %v625, %v623
    %v670 = vpack.c.b16 %v626, %v624
    %v671 = vpack.c.b16 %v629, %v627
    %v672 = vpack.c.b16 %v630, %v628
    %v673 = vpack.c.b16 %v633, %v631
    %v674 = vpack.c.b16 %v634, %v632
    %v675 = vpack.c.b16 %v637, %v635
    %v676 = vpack.c.b16 %v638, %v636
    %v677 = vpack.c.b16 %v641, %v639
    %v678 = vpack.c.b16 %v642, %v640
    %v679 = vpack.c.b16 %v645, %v643
    %v680 = vpack.c.b16 %v646, %v644
    %v681 = vpack.c.b16 %v649, %v647
    %v682 = vpack.c.b16 %v650, %v648
    %v683 = vpack.c.b16 %v653, %v651
    %v684 = vpack.c.b16 %v654, %v652
    %v685 = vpack.c.b16 %v657, %v655
    %v686 = vpack.c.b16 %v658, %v656
    %v687 = vpack.c.b16 %v661, %v659
    %v688 = vpack.c.b16 %v662, %v660
    %v689 = vpack.c.b16 %v665, %v663
    %v690 = vpack.c.b16 %v666, %v664
    %v716 = vsel %vm502, %v567, 0
    %718 = vmatpush.bf16.msra.mxu0 %v681
    %719 = vmatpush.bf16.msra.mxu0 %v679
    %720 = vmatpush.bf16.msra.mxu0 %v677
    %721 = vmatpush.bf16.msra.mxu0 %v675
    %722 = vmatpush.bf16.msra.mxu0 %v673
    %723 = vmatpush.bf16.msra.mxu0 %v671
    %724 = vmatpush.bf16.msra.mxu0 %v669
    %725 = vmatpush.bf16.msra.mxu0 %v667
    %726 = vmatmul.bf16.gmra.mxu0 %v566
    %v727 = vpop.f32.mrf.mxu0
    %v728 = vadd.f32 %v593, %v727
    %v729 = vpop.f32.mrf.mxu0
    %v730 = vadd.f32 %v593, %v729
    %731 = vdwg.mxu0
    %732 = vmatpush.bf16.msra.mxu0 0
    %733 = vmatpush.bf16.msra.mxu0 0
    %734 = vmatpush.bf16.msra.mxu0 0
    %735 = vmatpush.bf16.msra.mxu0 0
    %736 = vmatpush.bf16.msra.mxu0 %v689
    %737 = vmatpush.bf16.msra.mxu0 %v687
    %738 = vmatpush.bf16.msra.mxu0 %v685
    %739 = vmatpush.bf16.msra.mxu0 %v683
    %740 = vmatmul.bf16.gmra.mxu0 %v716
    %v741 = vpop.f32.mrf.mxu0
    %v742 = vadd.f32 %v728, %v741
    %v743 = vpop.f32.mrf.mxu0
    %v744 = vadd.f32 %v730, %v743
    %745 = vdwg.mxu0
    %746 = vmatpush.bf16.msra.mxu0 %v682
    %747 = vmatpush.bf16.msra.mxu0 %v680
    %748 = vmatpush.bf16.msra.mxu0 %v678
    %749 = vmatpush.bf16.msra.mxu0 %v676
    %750 = vmatpush.bf16.msra.mxu0 %v674
    %751 = vmatpush.bf16.msra.mxu0 %v672
    %752 = vmatpush.bf16.msra.mxu0 %v670
    %753 = vmatpush.bf16.msra.mxu0 %v668
    %754 = vmatmul.bf16.gmra.mxu0 %v566
    %v755 = vpop.f32.mrf.mxu0
    %v756 = vadd.f32 %v594, %v755
    %v757 = vpop.f32.mrf.mxu0
    %v758 = vadd.f32 %v594, %v757
    %759 = vdwg.mxu0
    %760 = vmatpush.bf16.msra.mxu0 0
    %761 = vmatpush.bf16.msra.mxu0 0
    %762 = vmatpush.bf16.msra.mxu0 0
    %763 = vmatpush.bf16.msra.mxu0 0
    %764 = vmatpush.bf16.msra.mxu0 %v690
    %765 = vmatpush.bf16.msra.mxu0 %v688
    %766 = vmatpush.bf16.msra.mxu0 %v686
    %767 = vmatpush.bf16.msra.mxu0 %v684
    %768 = vmatmul.bf16.gmra.mxu0 %v716
    %v769 = vpop.f32.mrf.mxu0
    %v770 = vadd.f32 %v756, %v769
    %v771 = vpop.f32.mrf.mxu0
    %v772 = vadd.f32 %v758, %v771
    %773 = vdwg.mxu0
    %v774 = vmax.f32 %v742, 0.0
    %v775 = vmax.f32 %v770, 0.0
    %v776 = vmax.f32 %v744, 0.0
    %v777 = vmax.f32 %v772, 0.0
    %v778 = vpack.c.bf16 %v776, %v774
    %v779 = vpack.c.bf16 %v777, %v775
    %s780 = scalar_lea.vmem [#allocation2], 384
    %v781 = vld [vmem:[%s780] sm:$0xff]
    %v782 = vld [vmem:[%s780 + $0x8] sm:$0xff]
    %v783 = vld [vmem:[%s780 + $0x10] sm:$0xff]
    %v784 = vld [vmem:[%s780 + $0x18] sm:$0xff]
    %v785 = vld [vmem:[%s780 + $0x20] sm:$0xff]
    %v786 = vld [vmem:[%s780 + $0x28] sm:$0xff]
    %v787 = vld [vmem:[%s780 + $0x30] sm:$0xff]
    %v788 = vld [vmem:[%s780 + $0x38] sm:$0xff]
    %v789 = vld [vmem:[%s780 + $0x40] sm:$0xff]
    %v790 = vld [vmem:[%s780 + $0x48] sm:$0xff]
    %v791 = vld [vmem:[%s780 + $0x50] sm:$0xff]
    %v792 = vld [vmem:[%s780 + $0x58] sm:$0xff]
    %v793 = vld [vmem:[%s780 + $0x60] sm:$0xff]
    %v794 = vld [vmem:[%s780 + $0x68] sm:$0xff]
    %v795 = vld [vmem:[%s780 + $0x70] sm:$0xff]
    %v796 = vld [vmem:[%s780 + $0x78] sm:$0xff]
    %v797 = vld [vmem:[%s780 + $0x80] sm:$0xff]
    %v798 = vld [vmem:[%s780 + $0x88] sm:$0xff]
    %v799 = vld [vmem:[%s780 + $0x90] sm:$0xff]
    %v800 = vld [vmem:[%s780 + $0x98] sm:$0xff]
    %v801 = vld [vmem:[%s780 + $0xa0] sm:$0xff]
    %v802 = vld [vmem:[%s780 + $0xa8] sm:$0xff]
    %v803 = vld [vmem:[%s780 + $0xb0] sm:$0xff]
    %v804 = vld [vmem:[%s780 + $0xb8] sm:$0xff]
    %v805 = vperm.slane %v40, 3
    %v806 = vperm.slane %v41, 3
    %v831 = vunpack.c.l.b16 %v781
    %v832 = vunpack.c.h.b16 %v781
    %v833 = vunpack.c.l.b16 %v782
    %v834 = vunpack.c.h.b16 %v782
    %v835 = vunpack.c.l.b16 %v783
    %v836 = vunpack.c.h.b16 %v783
    %v837 = vunpack.c.l.b16 %v784
    %v838 = vunpack.c.h.b16 %v784
    %v839 = vunpack.c.l.b16 %v785
    %v840 = vunpack.c.h.b16 %v785
    %v841 = vunpack.c.l.b16 %v786
    %v842 = vunpack.c.h.b16 %v786
    %v843 = vunpack.c.l.b16 %v787
    %v844 = vunpack.c.h.b16 %v787
    %v845 = vunpack.c.l.b16 %v788
    %v846 = vunpack.c.h.b16 %v788
    %v847 = vunpack.c.l.b16 %v789
    %v848 = vunpack.c.h.b16 %v789
    %v849 = vunpack.c.l.b16 %v790
    %v850 = vunpack.c.h.b16 %v790
    %v851 = vunpack.c.l.b16 %v791
    %v852 = vunpack.c.h.b16 %v791
    %v853 = vunpack.c.l.b16 %v792
    %v854 = vunpack.c.h.b16 %v792
    %v855 = vunpack.c.l.b16 %v793
    %v856 = vunpack.c.h.b16 %v793
    %v857 = vunpack.c.l.b16 %v794
    %v858 = vunpack.c.h.b16 %v794
    %v859 = vunpack.c.l.b16 %v795
    %v860 = vunpack.c.h.b16 %v795
    %v861 = vunpack.c.l.b16 %v796
    %v862 = vunpack.c.h.b16 %v796
    %v863 = vunpack.c.l.b16 %v797
    %v864 = vunpack.c.h.b16 %v797
    %v865 = vunpack.c.l.b16 %v798
    %v866 = vunpack.c.h.b16 %v798
    %v867 = vunpack.c.l.b16 %v799
    %v868 = vunpack.c.h.b16 %v799
    %v869 = vunpack.c.l.b16 %v800
    %v870 = vunpack.c.h.b16 %v800
    %v871 = vunpack.c.l.b16 %v801
    %v872 = vunpack.c.h.b16 %v801
    %v873 = vunpack.c.l.b16 %v802
    %v874 = vunpack.c.h.b16 %v802
    %v875 = vunpack.c.l.b16 %v803
    %v876 = vunpack.c.h.b16 %v803
    %v877 = vunpack.c.l.b16 %v804
    %v878 = vunpack.c.h.b16 %v804
    %v879 = vpack.c.b16 %v833, %v831
    %v880 = vpack.c.b16 %v834, %v832
    %v881 = vpack.c.b16 %v837, %v835
    %v882 = vpack.c.b16 %v838, %v836
    %v883 = vpack.c.b16 %v841, %v839
    %v884 = vpack.c.b16 %v842, %v840
    %v885 = vpack.c.b16 %v845, %v843
    %v886 = vpack.c.b16 %v846, %v844
    %v887 = vpack.c.b16 %v849, %v847
    %v888 = vpack.c.b16 %v850, %v848
    %v889 = vpack.c.b16 %v853, %v851
    %v890 = vpack.c.b16 %v854, %v852
    %v891 = vpack.c.b16 %v857, %v855
    %v892 = vpack.c.b16 %v858, %v856
    %v893 = vpack.c.b16 %v861, %v859
    %v894 = vpack.c.b16 %v862, %v860
    %v895 = vpack.c.b16 %v865, %v863
    %v896 = vpack.c.b16 %v866, %v864
    %v897 = vpack.c.b16 %v869, %v867
    %v898 = vpack.c.b16 %v870, %v868
    %v899 = vpack.c.b16 %v873, %v871
    %v900 = vpack.c.b16 %v874, %v872
    %v901 = vpack.c.b16 %v877, %v875
    %v902 = vpack.c.b16 %v878, %v876
    %v928 = vsel %vm502, %v779, 0
    %930 = vmatpush.bf16.msra.mxu0 %v893
    %931 = vmatpush.bf16.msra.mxu0 %v891
    %932 = vmatpush.bf16.msra.mxu0 %v889
    %933 = vmatpush.bf16.msra.mxu0 %v887
    %934 = vmatpush.bf16.msra.mxu0 %v885
    %935 = vmatpush.bf16.msra.mxu0 %v883
    %936 = vmatpush.bf16.msra.mxu0 %v881
    %937 = vmatpush.bf16.msra.mxu0 %v879
    %938 = vmatmul.bf16.gmra.mxu0 %v778
    %v939 = vpop.f32.mrf.mxu0
    %v940 = vadd.f32 %v805, %v939
    %v941 = vpop.f32.mrf.mxu0
    %v942 = vadd.f32 %v805, %v941
    %943 = vdwg.mxu0
    %944 = vmatpush.bf16.msra.mxu0 0
    %945 = vmatpush.bf16.msra.mxu0 0
    %946 = vmatpush.bf16.msra.mxu0 0
    %947 = vmatpush.bf16.msra.mxu0 0
    %948 = vmatpush.bf16.msra.mxu0 %v901
    %949 = vmatpush.bf16.msra.mxu0 %v899
    %950 = vmatpush.bf16.msra.mxu0 %v897
    %951 = vmatpush.bf16.msra.mxu0 %v895
    %952 = vmatmul.bf16.gmra.mxu0 %v928
    %v953 = vpop.f32.mrf.mxu0
    %v954 = vadd.f32 %v940, %v953
    %v955 = vpop.f32.mrf.mxu0
    %v956 = vadd.f32 %v942, %v955
    %957 = vdwg.mxu0
    %958 = vmatpush.bf16.msra.mxu0 %v894
    %959 = vmatpush.bf16.msra.mxu0 %v892
    %960 = vmatpush.bf16.msra.mxu0 %v890
    %961 = vmatpush.bf16.msra.mxu0 %v888
    %962 = vmatpush.bf16.msra.mxu0 %v886
    %963 = vmatpush.bf16.msra.mxu0 %v884
    %964 = vmatpush.bf16.msra.mxu0 %v882
    %965 = vmatpush.bf16.msra.mxu0 %v880
    %966 = vmatmul.bf16.gmra.mxu0 %v778
    %v967 = vpop.f32.mrf.mxu0
    %v968 = vadd.f32 %v806, %v967
    %v969 = vpop.f32.mrf.mxu0
    %v970 = vadd.f32 %v806, %v969
    %971 = vdwg.mxu0
    %972 = vmatpush.bf16.msra.mxu0 0
    %973 = vmatpush.bf16.msra.mxu0 0
    %974 = vmatpush.bf16.msra.mxu0 0
    %975 = vmatpush.bf16.msra.mxu0 0
    %976 = vmatpush.bf16.msra.mxu0 %v902
    %977 = vmatpush.bf16.msra.mxu0 %v900
    %978 = vmatpush.bf16.msra.mxu0 %v898
    %979 = vmatpush.bf16.msra.mxu0 %v896
    %980 = vmatmul.bf16.gmra.mxu0 %v928
    %v981 = vpop.f32.mrf.mxu0
    %v982 = vadd.f32 %v968, %v981
    %v983 = vpop.f32.mrf.mxu0
    %v984 = vadd.f32 %v970, %v983
    %985 = vdwg.mxu0
    %v986 = vmax.f32 %v954, 0.0
    %v987 = vmax.f32 %v982, 0.0
    %v988 = vmax.f32 %v956, 0.0
    %v989 = vmax.f32 %v984, 0.0
    %v990 = vpack.c.bf16 %v988, %v986
    %v991 = vpack.c.bf16 %v989, %v987
    %s992 = scalar_lea.vmem [#allocation2], 576
    %v993 = vld [vmem:[%s992] sm:$0xff]
    %v994 = vld [vmem:[%s992 + $0x8] sm:$0xff]
    %v995 = vld [vmem:[%s992 + $0x10] sm:$0xff]
    %v996 = vld [vmem:[%s992 + $0x18] sm:$0xff]
    %v997 = vld [vmem:[%s992 + $0x20] sm:$0xff]
    %v998 = vld [vmem:[%s992 + $0x28] sm:$0xff]
    %v999 = vld [vmem:[%s992 + $0x30] sm:$0xff]
    %v1000 = vld [vmem:[%s992 + $0x38] sm:$0xff]
    %v1001 = vld [vmem:[%s992 + $0x40] sm:$0xff]
    %v1002 = vld [vmem:[%s992 + $0x48] sm:$0xff]
    %v1003 = vld [vmem:[%s992 + $0x50] sm:$0xff]
    %v1004 = vld [vmem:[%s992 + $0x58] sm:$0xff]
    %v1005 = vld [vmem:[%s992 + $0x60] sm:$0xff]
    %v1006 = vld [vmem:[%s992 + $0x68] sm:$0xff]
    %v1007 = vld [vmem:[%s992 + $0x70] sm:$0xff]
    %v1008 = vld [vmem:[%s992 + $0x78] sm:$0xff]
    %v1009 = vld [vmem:[%s992 + $0x80] sm:$0xff]
    %v1010 = vld [vmem:[%s992 + $0x88] sm:$0xff]
    %v1011 = vld [vmem:[%s992 + $0x90] sm:$0xff]
    %v1012 = vld [vmem:[%s992 + $0x98] sm:$0xff]
    %v1013 = vld [vmem:[%s992 + $0xa0] sm:$0xff]
    %v1014 = vld [vmem:[%s992 + $0xa8] sm:$0xff]
    %v1015 = vld [vmem:[%s992 + $0xb0] sm:$0xff]
    %v1016 = vld [vmem:[%s992 + $0xb8] sm:$0xff]
    %v1017 = vperm.slane %v40, 4
    %v1018 = vperm.slane %v41, 4
    %v1043 = vunpack.c.l.b16 %v993
    %v1044 = vunpack.c.h.b16 %v993
    %v1045 = vunpack.c.l.b16 %v994
    %v1046 = vunpack.c.h.b16 %v994
    %v1047 = vunpack.c.l.b16 %v995
    %v1048 = vunpack.c.h.b16 %v995
    %v1049 = vunpack.c.l.b16 %v996
    %v1050 = vunpack.c.h.b16 %v996
    %v1051 = vunpack.c.l.b16 %v997
    %v1052 = vunpack.c.h.b16 %v997
    %v1053 = vunpack.c.l.b16 %v998
    %v1054 = vunpack.c.h.b16 %v998
    %v1055 = vunpack.c.l.b16 %v999
    %v1056 = vunpack.c.h.b16 %v999
    %v1057 = vunpack.c.l.b16 %v1000
    %v1058 = vunpack.c.h.b16 %v1000
    %v1059 = vunpack.c.l.b16 %v1001
    %v1060 = vunpack.c.h.b16 %v1001
    %v1061 = vunpack.c.l.b16 %v1002
    %v1062 = vunpack.c.h.b16 %v1002
    %v1063 = vunpack.c.l.b16 %v1003
    %v1064 = vunpack.c.h.b16 %v1003
    %v1065 = vunpack.c.l.b16 %v1004
    %v1066 = vunpack.c.h.b16 %v1004
    %v1067 = vunpack.c.l.b16 %v1005
    %v1068 = vunpack.c.h.b16 %v1005
    %v1069 = vunpack.c.l.b16 %v1006
    %v1070 = vunpack.c.h.b16 %v1006
    %v1071 = vunpack.c.l.b16 %v1007
    %v1072 = vunpack.c.h.b16 %v1007
    %v1073 = vunpack.c.l.b16 %v1008
    %v1074 = vunpack.c.h.b16 %v1008
    %v1075 = vunpack.c.l.b16 %v1009
    %v1076 = vunpack.c.h.b16 %v1009
    %v1077 = vunpack.c.l.b16 %v1010
    %v1078 = vunpack.c.h.b16 %v1010
    %v1079 = vunpack.c.l.b16 %v1011
    %v1080 = vunpack.c.h.b16 %v1011
    %v1081 = vunpack.c.l.b16 %v1012
    %v1082 = vunpack.c.h.b16 %v1012
    %v1083 = vunpack.c.l.b16 %v1013
    %v1084 = vunpack.c.h.b16 %v1013
    %v1085 = vunpack.c.l.b16 %v1014
    %v1086 = vunpack.c.h.b16 %v1014
    %v1087 = vunpack.c.l.b16 %v1015
    %v1088 = vunpack.c.h.b16 %v1015
    %v1089 = vunpack.c.l.b16 %v1016
    %v1090 = vunpack.c.h.b16 %v1016
    %v1091 = vpack.c.b16 %v1045, %v1043
    %v1092 = vpack.c.b16 %v1046, %v1044
    %v1093 = vpack.c.b16 %v1049, %v1047
    %v1094 = vpack.c.b16 %v1050, %v1048
    %v1095 = vpack.c.b16 %v1053, %v1051
    %v1096 = vpack.c.b16 %v1054, %v1052
    %v1097 = vpack.c.b16 %v1057, %v1055
    %v1098 = vpack.c.b16 %v1058, %v1056
    %v1099 = vpack.c.b16 %v1061, %v1059
    %v1100 = vpack.c.b16 %v1062, %v1060
    %v1101 = vpack.c.b16 %v1065, %v1063
    %v1102 = vpack.c.b16 %v1066, %v1064
    %v1103 = vpack.c.b16 %v1069, %v1067
    %v1104 = vpack.c.b16 %v1070, %v1068
    %v1105 = vpack.c.b16 %v1073, %v1071
    %v1106 = vpack.c.b16 %v1074, %v1072
    %v1107 = vpack.c.b16 %v1077, %v1075
    %v1108 = vpack.c.b16 %v1078, %v1076
    %v1109 = vpack.c.b16 %v1081, %v1079
    %v1110 = vpack.c.b16 %v1082, %v1080
    %v1111 = vpack.c.b16 %v1085, %v1083
    %v1112 = vpack.c.b16 %v1086, %v1084
    %v1113 = vpack.c.b16 %v1089, %v1087
    %v1114 = vpack.c.b16 %v1090, %v1088
    %v1140 = vsel %vm502, %v991, 0
    %1142 = vmatpush.bf16.msra.mxu0 %v1105
    %1143 = vmatpush.bf16.msra.mxu0 %v1103
    %1144 = vmatpush.bf16.msra.mxu0 %v1101
    %1145 = vmatpush.bf16.msra.mxu0 %v1099
    %1146 = vmatpush.bf16.msra.mxu0 %v1097
    %1147 = vmatpush.bf16.msra.mxu0 %v1095
    %1148 = vmatpush.bf16.msra.mxu0 %v1093
    %1149 = vmatpush.bf16.msra.mxu0 %v1091
    %1150 = vmatmul.bf16.gmra.mxu0 %v990
    %v1151 = vpop.f32.mrf.mxu0
    %v1152 = vadd.f32 %v1017, %v1151
    %v1153 = vpop.f32.mrf.mxu0
    %v1154 = vadd.f32 %v1017, %v1153
    %1155 = vdwg.mxu0
    %1156 = vmatpush.bf16.msra.mxu0 0
    %1157 = vmatpush.bf16.msra.mxu0 0
    %1158 = vmatpush.bf16.msra.mxu0 0
    %1159 = vmatpush.bf16.msra.mxu0 0
    %1160 = vmatpush.bf16.msra.mxu0 %v1113
    %1161 = vmatpush.bf16.msra.mxu0 %v1111
    %1162 = vmatpush.bf16.msra.mxu0 %v1109
    %1163 = vmatpush.bf16.msra.mxu0 %v1107
    %1164 = vmatmul.bf16.gmra.mxu0 %v1140
    %v1165 = vpop.f32.mrf.mxu0
    %v1166 = vadd.f32 %v1152, %v1165
    %v1167 = vpop.f32.mrf.mxu0
    %v1168 = vadd.f32 %v1154, %v1167
    %1169 = vdwg.mxu0
    %1170 = vmatpush.bf16.msra.mxu0 %v1106
    %1171 = vmatpush.bf16.msra.mxu0 %v1104
    %1172 = vmatpush.bf16.msra.mxu0 %v1102
    %1173 = vmatpush.bf16.msra.mxu0 %v1100
    %1174 = vmatpush.bf16.msra.mxu0 %v1098
    %1175 = vmatpush.bf16.msra.mxu0 %v1096
    %1176 = vmatpush.bf16.msra.mxu0 %v1094
    %1177 = vmatpush.bf16.msra.mxu0 %v1092
    %1178 = vmatmul.bf16.gmra.mxu0 %v990
    %v1179 = vpop.f32.mrf.mxu0
    %v1180 = vadd.f32 %v1018, %v1179
    %v1181 = vpop.f32.mrf.mxu0
    %v1182 = vadd.f32 %v1018, %v1181
    %1183 = vdwg.mxu0
    %1184 = vmatpush.bf16.msra.mxu0 0
    %1185 = vmatpush.bf16.msra.mxu0 0
    %1186 = vmatpush.bf16.msra.mxu0 0
    %1187 = vmatpush.bf16.msra.mxu0 0
    %1188 = vmatpush.bf16.msra.mxu0 %v1114
    %1189 = vmatpush.bf16.msra.mxu0 %v1112
    %1190 = vmatpush.bf16.msra.mxu0 %v1110
    %1191 = vmatpush.bf16.msra.mxu0 %v1108
    %1192 = vmatmul.bf16.gmra.mxu0 %v1140
    %v1193 = vpop.f32.mrf.mxu0
    %v1194 = vadd.f32 %v1180, %v1193
    %v1195 = vpop.f32.mrf.mxu0
    %v1196 = vadd.f32 %v1182, %v1195
    %1197 = vdwg.mxu0
    %v1198 = vmax.f32 %v1166, 0.0
    %v1199 = vmax.f32 %v1194, 0.0
    %v1200 = vmax.f32 %v1168, 0.0
    %v1201 = vmax.f32 %v1196, 0.0
    %v1202 = vpack.c.bf16 %v1200, %v1198
    %v1203 = vpack.c.bf16 %v1201, %v1199
    %s1204 = scalar_lea.vmem [#allocation2], 768
    %v1205 = vld [vmem:[%s1204] sm:$0xff]
    %v1206 = vld [vmem:[%s1204 + $0x8] sm:$0xff]
    %v1207 = vld [vmem:[%s1204 + $0x10] sm:$0xff]
    %v1208 = vld [vmem:[%s1204 + $0x18] sm:$0xff]
    %v1209 = vld [vmem:[%s1204 + $0x20] sm:$0xff]
    %v1210 = vld [vmem:[%s1204 + $0x28] sm:$0xff]
    %v1211 = vld [vmem:[%s1204 + $0x30] sm:$0xff]
    %v1212 = vld [vmem:[%s1204 + $0x38] sm:$0xff]
    %v1213 = vld [vmem:[%s1204 + $0x40] sm:$0xff]
    %v1214 = vld [vmem:[%s1204 + $0x48] sm:$0xff]
    %v1215 = vld [vmem:[%s1204 + $0x50] sm:$0xff]
    %v1216 = vld [vmem:[%s1204 + $0x58] sm:$0xff]
    %v1217 = vld [vmem:[%s1204 + $0x60] sm:$0xff]
    %v1218 = vld [vmem:[%s1204 + $0x68] sm:$0xff]
    %v1219 = vld [vmem:[%s1204 + $0x70] sm:$0xff]
    %v1220 = vld [vmem:[%s1204 + $0x78] sm:$0xff]
    %v1221 = vld [vmem:[%s1204 + $0x80] sm:$0xff]
    %v1222 = vld [vmem:[%s1204 + $0x88] sm:$0xff]
    %v1223 = vld [vmem:[%s1204 + $0x90] sm:$0xff]
    %v1224 = vld [vmem:[%s1204 + $0x98] sm:$0xff]
    %v1225 = vld [vmem:[%s1204 + $0xa0] sm:$0xff]
    %v1226 = vld [vmem:[%s1204 + $0xa8] sm:$0xff]
    %v1227 = vld [vmem:[%s1204 + $0xb0] sm:$0xff]
    %v1228 = vld [vmem:[%s1204 + $0xb8] sm:$0xff]
    %v1229 = vperm.slane %v40, 5
    %v1230 = vperm.slane %v41, 5
    %v1255 = vunpack.c.l.b16 %v1205
    %v1256 = vunpack.c.h.b16 %v1205
    %v1257 = vunpack.c.l.b16 %v1206
    %v1258 = vunpack.c.h.b16 %v1206
    %v1259 = vunpack.c.l.b16 %v1207
    %v1260 = vunpack.c.h.b16 %v1207
    %v1261 = vunpack.c.l.b16 %v1208
    %v1262 = vunpack.c.h.b16 %v1208
    %v1263 = vunpack.c.l.b16 %v1209
    %v1264 = vunpack.c.h.b16 %v1209
    %v1265 = vunpack.c.l.b16 %v1210
    %v1266 = vunpack.c.h.b16 %v1210
    %v1267 = vunpack.c.l.b16 %v1211
    %v1268 = vunpack.c.h.b16 %v1211
    %v1269 = vunpack.c.l.b16 %v1212
    %v1270 = vunpack.c.h.b16 %v1212
    %v1271 = vunpack.c.l.b16 %v1213
    %v1272 = vunpack.c.h.b16 %v1213
    %v1273 = vunpack.c.l.b16 %v1214
    %v1274 = vunpack.c.h.b16 %v1214
    %v1275 = vunpack.c.l.b16 %v1215
    %v1276 = vunpack.c.h.b16 %v1215
    %v1277 = vunpack.c.l.b16 %v1216
    %v1278 = vunpack.c.h.b16 %v1216
    %v1279 = vunpack.c.l.b16 %v1217
    %v1280 = vunpack.c.h.b16 %v1217
    %v1281 = vunpack.c.l.b16 %v1218
    %v1282 = vunpack.c.h.b16 %v1218
    %v1283 = vunpack.c.l.b16 %v1219
    %v1284 = vunpack.c.h.b16 %v1219
    %v1285 = vunpack.c.l.b16 %v1220
    %v1286 = vunpack.c.h.b16 %v1220
    %v1287 = vunpack.c.l.b16 %v1221
    %v1288 = vunpack.c.h.b16 %v1221
    %v1289 = vunpack.c.l.b16 %v1222
    %v1290 = vunpack.c.h.b16 %v1222
    %v1291 = vunpack.c.l.b16 %v1223
    %v1292 = vunpack.c.h.b16 %v1223
    %v1293 = vunpack.c.l.b16 %v1224
    %v1294 = vunpack.c.h.b16 %v1224
    %v1295 = vunpack.c.l.b16 %v1225
    %v1296 = vunpack.c.h.b16 %v1225
    %v1297 = vunpack.c.l.b16 %v1226
    %v1298 = vunpack.c.h.b16 %v1226
    %v1299 = vunpack.c.l.b16 %v1227
    %v1300 = vunpack.c.h.b16 %v1227
    %v1301 = vunpack.c.l.b16 %v1228
    %v1302 = vunpack.c.h.b16 %v1228
    %v1303 = vpack.c.b16 %v1257, %v1255
    %v1304 = vpack.c.b16 %v1258, %v1256
    %v1305 = vpack.c.b16 %v1261, %v1259
    %v1306 = vpack.c.b16 %v1262, %v1260
    %v1307 = vpack.c.b16 %v1265, %v1263
    %v1308 = vpack.c.b16 %v1266, %v1264
    %v1309 = vpack.c.b16 %v1269, %v1267
    %v1310 = vpack.c.b16 %v1270, %v1268
    %v1311 = vpack.c.b16 %v1273, %v1271
    %v1312 = vpack.c.b16 %v1274, %v1272
    %v1313 = vpack.c.b16 %v1277, %v1275
    %v1314 = vpack.c.b16 %v1278, %v1276
    %v1315 = vpack.c.b16 %v1281, %v1279
    %v1316 = vpack.c.b16 %v1282, %v1280
    %v1317 = vpack.c.b16 %v1285, %v1283
    %v1318 = vpack.c.b16 %v1286, %v1284
    %v1319 = vpack.c.b16 %v1289, %v1287
    %v1320 = vpack.c.b16 %v1290, %v1288
    %v1321 = vpack.c.b16 %v1293, %v1291
    %v1322 = vpack.c.b16 %v1294, %v1292
    %v1323 = vpack.c.b16 %v1297, %v1295
    %v1324 = vpack.c.b16 %v1298, %v1296
    %v1325 = vpack.c.b16 %v1301, %v1299
    %v1326 = vpack.c.b16 %v1302, %v1300
    %v1352 = vsel %vm502, %v1203, 0
    %1354 = vmatpush.bf16.msra.mxu0 %v1317
    %1355 = vmatpush.bf16.msra.mxu0 %v1315
    %1356 = vmatpush.bf16.msra.mxu0 %v1313
    %1357 = vmatpush.bf16.msra.mxu0 %v1311
    %1358 = vmatpush.bf16.msra.mxu0 %v1309
    %1359 = vmatpush.bf16.msra.mxu0 %v1307
    %1360 = vmatpush.bf16.msra.mxu0 %v1305
    %1361 = vmatpush.bf16.msra.mxu0 %v1303
    %1362 = vmatmul.bf16.gmra.mxu0 %v1202
    %v1363 = vpop.f32.mrf.mxu0
    %v1364 = vadd.f32 %v1229, %v1363
    %v1365 = vpop.f32.mrf.mxu0
    %v1366 = vadd.f32 %v1229, %v1365
    %1367 = vdwg.mxu0
    %1368 = vmatpush.bf16.msra.mxu0 0
    %1369 = vmatpush.bf16.msra.mxu0 0
    %1370 = vmatpush.bf16.msra.mxu0 0
    %1371 = vmatpush.bf16.msra.mxu0 0
    %1372 = vmatpush.bf16.msra.mxu0 %v1325
    %1373 = vmatpush.bf16.msra.mxu0 %v1323
    %1374 = vmatpush.bf16.msra.mxu0 %v1321
    %1375 = vmatpush.bf16.msra.mxu0 %v1319
    %1376 = vmatmul.bf16.gmra.mxu0 %v1352
    %v1377 = vpop.f32.mrf.mxu0
    %v1378 = vadd.f32 %v1364, %v1377
    %v1379 = vpop.f32.mrf.mxu0
    %v1380 = vadd.f32 %v1366, %v1379
    %1381 = vdwg.mxu0
    %1382 = vmatpush.bf16.msra.mxu0 %v1318
    %1383 = vmatpush.bf16.msra.mxu0 %v1316
    %1384 = vmatpush.bf16.msra.mxu0 %v1314
    %1385 = vmatpush.bf16.msra.mxu0 %v1312
    %1386 = vmatpush.bf16.msra.mxu0 %v1310
    %1387 = vmatpush.bf16.msra.mxu0 %v1308
    %1388 = vmatpush.bf16.msra.mxu0 %v1306
    %1389 = vmatpush.bf16.msra.mxu0 %v1304
    %1390 = vmatmul.bf16.gmra.mxu0 %v1202
    %v1391 = vpop.f32.mrf.mxu0
    %v1392 = vadd.f32 %v1230, %v1391
    %v1393 = vpop.f32.mrf.mxu0
    %v1394 = vadd.f32 %v1230, %v1393
    %1395 = vdwg.mxu0
    %1396 = vmatpush.bf16.msra.mxu0 0
    %1397 = vmatpush.bf16.msra.mxu0 0
    %1398 = vmatpush.bf16.msra.mxu0 0
    %1399 = vmatpush.bf16.msra.mxu0 0
    %1400 = vmatpush.bf16.msra.mxu0 %v1326
    %1401 = vmatpush.bf16.msra.mxu0 %v1324
    %1402 = vmatpush.bf16.msra.mxu0 %v1322
    %1403 = vmatpush.bf16.msra.mxu0 %v1320
    %1404 = vmatmul.bf16.gmra.mxu0 %v1352
    %v1405 = vpop.f32.mrf.mxu0
    %v1406 = vadd.f32 %v1392, %v1405
    %v1407 = vpop.f32.mrf.mxu0
    %v1408 = vadd.f32 %v1394, %v1407
    %1409 = vdwg.mxu0
    %v1410 = vmax.f32 %v1378, 0.0
    %v1411 = vmax.f32 %v1406, 0.0
    %v1412 = vmax.f32 %v1380, 0.0
    %v1413 = vmax.f32 %v1408, 0.0
    %v1414 = vpack.c.bf16 %v1412, %v1410
    %v1415 = vpack.c.bf16 %v1413, %v1411
    %s1416 = scalar_lea.vmem [#allocation2], 960
    %v1417 = vld [vmem:[%s1416] sm:$0xff]
    %v1418 = vld [vmem:[%s1416 + $0x8] sm:$0xff]
    %v1419 = vld [vmem:[%s1416 + $0x10] sm:$0xff]
    %v1420 = vld [vmem:[%s1416 + $0x18] sm:$0xff]
    %v1421 = vld [vmem:[%s1416 + $0x20] sm:$0xff]
    %v1422 = vld [vmem:[%s1416 + $0x28] sm:$0xff]
    %v1423 = vld [vmem:[%s1416 + $0x30] sm:$0xff]
    %v1424 = vld [vmem:[%s1416 + $0x38] sm:$0xff]
    %v1425 = vld [vmem:[%s1416 + $0x40] sm:$0xff]
    %v1426 = vld [vmem:[%s1416 + $0x48] sm:$0xff]
    %v1427 = vld [vmem:[%s1416 + $0x50] sm:$0xff]
    %v1428 = vld [vmem:[%s1416 + $0x58] sm:$0xff]
    %v1429 = vld [vmem:[%s1416 + $0x60] sm:$0xff]
    %v1430 = vld [vmem:[%s1416 + $0x68] sm:$0xff]
    %v1431 = vld [vmem:[%s1416 + $0x70] sm:$0xff]
    %v1432 = vld [vmem:[%s1416 + $0x78] sm:$0xff]
    %v1433 = vld [vmem:[%s1416 + $0x80] sm:$0xff]
    %v1434 = vld [vmem:[%s1416 + $0x88] sm:$0xff]
    %v1435 = vld [vmem:[%s1416 + $0x90] sm:$0xff]
    %v1436 = vld [vmem:[%s1416 + $0x98] sm:$0xff]
    %v1437 = vld [vmem:[%s1416 + $0xa0] sm:$0xff]
    %v1438 = vld [vmem:[%s1416 + $0xa8] sm:$0xff]
    %v1439 = vld [vmem:[%s1416 + $0xb0] sm:$0xff]
    %v1440 = vld [vmem:[%s1416 + $0xb8] sm:$0xff]
    %v1441 = vperm.slane %v40, 6
    %v1442 = vperm.slane %v41, 6
    %v1467 = vunpack.c.l.b16 %v1417
    %v1468 = vunpack.c.h.b16 %v1417
    %v1469 = vunpack.c.l.b16 %v1418
    %v1470 = vunpack.c.h.b16 %v1418
    %v1471 = vunpack.c.l.b16 %v1419
    %v1472 = vunpack.c.h.b16 %v1419
    %v1473 = vunpack.c.l.b16 %v1420
    %v1474 = vunpack.c.h.b16 %v1420
    %v1475 = vunpack.c.l.b16 %v1421
    %v1476 = vunpack.c.h.b16 %v1421
    %v1477 = vunpack.c.l.b16 %v1422
    %v1478 = vunpack.c.h.b16 %v1422
    %v1479 = vunpack.c.l.b16 %v1423
    %v1480 = vunpack.c.h.b16 %v1423
    %v1481 = vunpack.c.l.b16 %v1424
    %v1482 = vunpack.c.h.b16 %v1424
    %v1483 = vunpack.c.l.b16 %v1425
    %v1484 = vunpack.c.h.b16 %v1425
    %v1485 = vunpack.c.l.b16 %v1426
    %v1486 = vunpack.c.h.b16 %v1426
    %v1487 = vunpack.c.l.b16 %v1427
    %v1488 = vunpack.c.h.b16 %v1427
    %v1489 = vunpack.c.l.b16 %v1428
    %v1490 = vunpack.c.h.b16 %v1428
    %v1491 = vunpack.c.l.b16 %v1429
    %v1492 = vunpack.c.h.b16 %v1429
    %v1493 = vunpack.c.l.b16 %v1430
    %v1494 = vunpack.c.h.b16 %v1430
    %v1495 = vunpack.c.l.b16 %v1431
    %v1496 = vunpack.c.h.b16 %v1431
    %v1497 = vunpack.c.l.b16 %v1432
    %v1498 = vunpack.c.h.b16 %v1432
    %v1499 = vunpack.c.l.b16 %v1433
    %v1500 = vunpack.c.h.b16 %v1433
    %v1501 = vunpack.c.l.b16 %v1434
    %v1502 = vunpack.c.h.b16 %v1434
    %v1503 = vunpack.c.l.b16 %v1435
    %v1504 = vunpack.c.h.b16 %v1435
    %v1505 = vunpack.c.l.b16 %v1436
    %v1506 = vunpack.c.h.b16 %v1436
    %v1507 = vunpack.c.l.b16 %v1437
    %v1508 = vunpack.c.h.b16 %v1437
    %v1509 = vunpack.c.l.b16 %v1438
    %v1510 = vunpack.c.h.b16 %v1438
    %v1511 = vunpack.c.l.b16 %v1439
    %v1512 = vunpack.c.h.b16 %v1439
    %v1513 = vunpack.c.l.b16 %v1440
    %v1514 = vunpack.c.h.b16 %v1440
    %v1515 = vpack.c.b16 %v1469, %v1467
    %v1516 = vpack.c.b16 %v1470, %v1468
    %v1517 = vpack.c.b16 %v1473, %v1471
    %v1518 = vpack.c.b16 %v1474, %v1472
    %v1519 = vpack.c.b16 %v1477, %v1475
    %v1520 = vpack.c.b16 %v1478, %v1476
    %v1521 = vpack.c.b16 %v1481, %v1479
    %v1522 = vpack.c.b16 %v1482, %v1480
    %v1523 = vpack.c.b16 %v1485, %v1483
    %v1524 = vpack.c.b16 %v1486, %v1484
    %v1525 = vpack.c.b16 %v1489, %v1487
    %v1526 = vpack.c.b16 %v1490, %v1488
    %v1527 = vpack.c.b16 %v1493, %v1491
    %v1528 = vpack.c.b16 %v1494, %v1492
    %v1529 = vpack.c.b16 %v1497, %v1495
    %v1530 = vpack.c.b16 %v1498, %v1496
    %v1531 = vpack.c.b16 %v1501, %v1499
    %v1532 = vpack.c.b16 %v1502, %v1500
    %v1533 = vpack.c.b16 %v1505, %v1503
    %v1534 = vpack.c.b16 %v1506, %v1504
    %v1535 = vpack.c.b16 %v1509, %v1507
    %v1536 = vpack.c.b16 %v1510, %v1508
    %v1537 = vpack.c.b16 %v1513, %v1511
    %v1538 = vpack.c.b16 %v1514, %v1512
    %v1564 = vsel %vm502, %v1415, 0
    %1566 = vmatpush.bf16.msra.mxu0 %v1529
    %1567 = vmatpush.bf16.msra.mxu0 %v1527
    %1568 = vmatpush.bf16.msra.mxu0 %v1525
    %1569 = vmatpush.bf16.msra.mxu0 %v1523
    %1570 = vmatpush.bf16.msra.mxu0 %v1521
    %1571 = vmatpush.bf16.msra.mxu0 %v1519
    %1572 = vmatpush.bf16.msra.mxu0 %v1517
    %1573 = vmatpush.bf16.msra.mxu0 %v1515
    %1574 = vmatmul.bf16.gmra.mxu0 %v1414
    %v1575 = vpop.f32.mrf.mxu0
    %v1576 = vadd.f32 %v1441, %v1575
    %v1577 = vpop.f32.mrf.mxu0
    %v1578 = vadd.f32 %v1441, %v1577
    %1579 = vdwg.mxu0
    %1580 = vmatpush.bf16.msra.mxu0 0
    %1581 = vmatpush.bf16.msra.mxu0 0
    %1582 = vmatpush.bf16.msra.mxu0 0
    %1583 = vmatpush.bf16.msra.mxu0 0
    %1584 = vmatpush.bf16.msra.mxu0 %v1537
    %1585 = vmatpush.bf16.msra.mxu0 %v1535
    %1586 = vmatpush.bf16.msra.mxu0 %v1533
    %1587 = vmatpush.bf16.msra.mxu0 %v1531
    %1588 = vmatmul.bf16.gmra.mxu0 %v1564
    %v1589 = vpop.f32.mrf.mxu0
    %v1590 = vadd.f32 %v1576, %v1589
    %v1591 = vpop.f32.mrf.mxu0
    %v1592 = vadd.f32 %v1578, %v1591
    %1593 = vdwg.mxu0
    %1594 = vmatpush.bf16.msra.mxu0 %v1530
    %1595 = vmatpush.bf16.msra.mxu0 %v1528
    %1596 = vmatpush.bf16.msra.mxu0 %v1526
    %1597 = vmatpush.bf16.msra.mxu0 %v1524
    %1598 = vmatpush.bf16.msra.mxu0 %v1522
    %1599 = vmatpush.bf16.msra.mxu0 %v1520
    %1600 = vmatpush.bf16.msra.mxu0 %v1518
    %1601 = vmatpush.bf16.msra.mxu0 %v1516
    %1602 = vmatmul.bf16.gmra.mxu0 %v1414
    %v1603 = vpop.f32.mrf.mxu0
    %v1604 = vadd.f32 %v1442, %v1603
    %v1605 = vpop.f32.mrf.mxu0
    %v1606 = vadd.f32 %v1442, %v1605
    %1607 = vdwg.mxu0
    %1608 = vmatpush.bf16.msra.mxu0 0
    %1609 = vmatpush.bf16.msra.mxu0 0
    %1610 = vmatpush.bf16.msra.mxu0 0
    %1611 = vmatpush.bf16.msra.mxu0 0
    %1612 = vmatpush.bf16.msra.mxu0 %v1538
    %1613 = vmatpush.bf16.msra.mxu0 %v1536
    %1614 = vmatpush.bf16.msra.mxu0 %v1534
    %1615 = vmatpush.bf16.msra.mxu0 %v1532
    %1616 = vmatmul.bf16.gmra.mxu0 %v1564
    %v1617 = vpop.f32.mrf.mxu0
    %v1618 = vadd.f32 %v1604, %v1617
    %v1619 = vpop.f32.mrf.mxu0
    %v1620 = vadd.f32 %v1606, %v1619
    %1621 = vdwg.mxu0
    %v1622 = vmax.f32 %v1590, 0.0
    %v1623 = vmax.f32 %v1618, 0.0
    %v1624 = vmax.f32 %v1592, 0.0
    %v1625 = vmax.f32 %v1620, 0.0
    %v1626 = vpack.c.bf16 %v1624, %v1622
    %v1627 = vpack.c.bf16 %v1625, %v1623
    %s1628 = scalar_lea.vmem [#allocation2], 1152
    %v1629 = vld [vmem:[%s1628] sm:$0xff]
    %v1630 = vld [vmem:[%s1628 + $0x8] sm:$0xff]
    %v1631 = vld [vmem:[%s1628 + $0x10] sm:$0xff]
    %v1632 = vld [vmem:[%s1628 + $0x18] sm:$0xff]
    %v1633 = vld [vmem:[%s1628 + $0x20] sm:$0xff]
    %v1634 = vld [vmem:[%s1628 + $0x28] sm:$0xff]
    %v1635 = vld [vmem:[%s1628 + $0x30] sm:$0xff]
    %v1636 = vld [vmem:[%s1628 + $0x38] sm:$0xff]
    %v1637 = vld [vmem:[%s1628 + $0x40] sm:$0xff]
    %v1638 = vld [vmem:[%s1628 + $0x48] sm:$0xff]
    %v1639 = vld [vmem:[%s1628 + $0x50] sm:$0xff]
    %v1640 = vld [vmem:[%s1628 + $0x58] sm:$0xff]
    %v1641 = vld [vmem:[%s1628 + $0x60] sm:$0xff]
    %v1642 = vld [vmem:[%s1628 + $0x68] sm:$0xff]
    %v1643 = vld [vmem:[%s1628 + $0x70] sm:$0xff]
    %v1644 = vld [vmem:[%s1628 + $0x78] sm:$0xff]
    %v1645 = vld [vmem:[%s1628 + $0x80] sm:$0xff]
    %v1646 = vld [vmem:[%s1628 + $0x88] sm:$0xff]
    %v1647 = vld [vmem:[%s1628 + $0x90] sm:$0xff]
    %v1648 = vld [vmem:[%s1628 + $0x98] sm:$0xff]
    %v1649 = vld [vmem:[%s1628 + $0xa0] sm:$0xff]
    %v1650 = vld [vmem:[%s1628 + $0xa8] sm:$0xff]
    %v1651 = vld [vmem:[%s1628 + $0xb0] sm:$0xff]
    %v1652 = vld [vmem:[%s1628 + $0xb8] sm:$0xff]
    %v1653 = vperm.slane %v40, 7
    %v1654 = vperm.slane %v41, 7
    %v1679 = vunpack.c.l.b16 %v1629
    %v1680 = vunpack.c.h.b16 %v1629
    %v1681 = vunpack.c.l.b16 %v1630
    %v1682 = vunpack.c.h.b16 %v1630
    %v1683 = vunpack.c.l.b16 %v1631
    %v1684 = vunpack.c.h.b16 %v1631
    %v1685 = vunpack.c.l.b16 %v1632
    %v1686 = vunpack.c.h.b16 %v1632
    %v1687 = vunpack.c.l.b16 %v1633
    %v1688 = vunpack.c.h.b16 %v1633
    %v1689 = vunpack.c.l.b16 %v1634
    %v1690 = vunpack.c.h.b16 %v1634
    %v1691 = vunpack.c.l.b16 %v1635
    %v1692 = vunpack.c.h.b16 %v1635
    %v1693 = vunpack.c.l.b16 %v1636
    %v1694 = vunpack.c.h.b16 %v1636
    %v1695 = vunpack.c.l.b16 %v1637
    %v1696 = vunpack.c.h.b16 %v1637
    %v1697 = vunpack.c.l.b16 %v1638
    %v1698 = vunpack.c.h.b16 %v1638
    %v1699 = vunpack.c.l.b16 %v1639
    %v1700 = vunpack.c.h.b16 %v1639
    %v1701 = vunpack.c.l.b16 %v1640
    %v1702 = vunpack.c.h.b16 %v1640
    %v1703 = vunpack.c.l.b16 %v1641
    %v1704 = vunpack.c.h.b16 %v1641
    %v1705 = vunpack.c.l.b16 %v1642
    %v1706 = vunpack.c.h.b16 %v1642
    %v1707 = vunpack.c.l.b16 %v1643
    %v1708 = vunpack.c.h.b16 %v1643
    %v1709 = vunpack.c.l.b16 %v1644
    %v1710 = vunpack.c.h.b16 %v1644
    %v1711 = vunpack.c.l.b16 %v1645
    %v1712 = vunpack.c.h.b16 %v1645
    %v1713 = vunpack.c.l.b16 %v1646
    %v1714 = vunpack.c.h.b16 %v1646
    %v1715 = vunpack.c.l.b16 %v1647
    %v1716 = vunpack.c.h.b16 %v1647
    %v1717 = vunpack.c.l.b16 %v1648
    %v1718 = vunpack.c.h.b16 %v1648
    %v1719 = vunpack.c.l.b16 %v1649
    %v1720 = vunpack.c.h.b16 %v1649
    %v1721 = vunpack.c.l.b16 %v1650
    %v1722 = vunpack.c.h.b16 %v1650
    %v1723 = vunpack.c.l.b16 %v1651
    %v1724 = vunpack.c.h.b16 %v1651
    %v1725 = vunpack.c.l.b16 %v1652
    %v1726 = vunpack.c.h.b16 %v1652
    %v1727 = vpack.c.b16 %v1681, %v1679
    %v1728 = vpack.c.b16 %v1682, %v1680
    %v1729 = vpack.c.b16 %v1685, %v1683
    %v1730 = vpack.c.b16 %v1686, %v1684
    %v1731 = vpack.c.b16 %v1689, %v1687
    %v1732 = vpack.c.b16 %v1690, %v1688
    %v1733 = vpack.c.b16 %v1693, %v1691
    %v1734 = vpack.c.b16 %v1694, %v1692
    %v1735 = vpack.c.b16 %v1697, %v1695
    %v1736 = vpack.c.b16 %v1698, %v1696
    %v1737 = vpack.c.b16 %v1701, %v1699
    %v1738 = vpack.c.b16 %v1702, %v1700
    %v1739 = vpack.c.b16 %v1705, %v1703
    %v1740 = vpack.c.b16 %v1706, %v1704
    %v1741 = vpack.c.b16 %v1709, %v1707
    %v1742 = vpack.c.b16 %v1710, %v1708
    %v1743 = vpack.c.b16 %v1713, %v1711
    %v1744 = vpack.c.b16 %v1714, %v1712
    %v1745 = vpack.c.b16 %v1717, %v1715
    %v1746 = vpack.c.b16 %v1718, %v1716
    %v1747 = vpack.c.b16 %v1721, %v1719
    %v1748 = vpack.c.b16 %v1722, %v1720
    %v1749 = vpack.c.b16 %v1725, %v1723
    %v1750 = vpack.c.b16 %v1726, %v1724
    %v1776 = vsel %vm502, %v1627, 0
    %1778 = vmatpush.bf16.msra.mxu0 %v1741
    %1779 = vmatpush.bf16.msra.mxu0 %v1739
    %1780 = vmatpush.bf16.msra.mxu0 %v1737
    %1781 = vmatpush.bf16.msra.mxu0 %v1735
    %1782 = vmatpush.bf16.msra.mxu0 %v1733
    %1783 = vmatpush.bf16.msra.mxu0 %v1731
    %1784 = vmatpush.bf16.msra.mxu0 %v1729
    %1785 = vmatpush.bf16.msra.mxu0 %v1727
    %1786 = vmatmul.bf16.gmra.mxu0 %v1626
    %v1787 = vpop.f32.mrf.mxu0
    %v1788 = vadd.f32 %v1653, %v1787
    %v1789 = vpop.f32.mrf.mxu0
    %v1790 = vadd.f32 %v1653, %v1789
    %1791 = vdwg.mxu0
    %1792 = vmatpush.bf16.msra.mxu0 0
    %1793 = vmatpush.bf16.msra.mxu0 0
    %1794 = vmatpush.bf16.msra.mxu0 0
    %1795 = vmatpush.bf16.msra.mxu0 0
    %1796 = vmatpush.bf16.msra.mxu0 %v1749
    %1797 = vmatpush.bf16.msra.mxu0 %v1747
    %1798 = vmatpush.bf16.msra.mxu0 %v1745
    %1799 = vmatpush.bf16.msra.mxu0 %v1743
    %1800 = vmatmul.bf16.gmra.mxu0 %v1776
    %v1801 = vpop.f32.mrf.mxu0
    %v1802 = vadd.f32 %v1788, %v1801
    %v1803 = vpop.f32.mrf.mxu0
    %v1804 = vadd.f32 %v1790, %v1803
    %1805 = vdwg.mxu0
    %1806 = vmatpush.bf16.msra.mxu0 %v1742
    %1807 = vmatpush.bf16.msra.mxu0 %v1740
    %1808 = vmatpush.bf16.msra.mxu0 %v1738
    %1809 = vmatpush.bf16.msra.mxu0 %v1736
    %1810 = vmatpush.bf16.msra.mxu0 %v1734
    %1811 = vmatpush.bf16.msra.mxu0 %v1732
    %1812 = vmatpush.bf16.msra.mxu0 %v1730
    %1813 = vmatpush.bf16.msra.mxu0 %v1728
    %1814 = vmatmul.bf16.gmra.mxu0 %v1626
    %v1815 = vpop.f32.mrf.mxu0
    %v1816 = vadd.f32 %v1654, %v1815
    %v1817 = vpop.f32.mrf.mxu0
    %v1818 = vadd.f32 %v1654, %v1817
    %1819 = vdwg.mxu0
    %1820 = vmatpush.bf16.msra.mxu0 0
    %1821 = vmatpush.bf16.msra.mxu0 0
    %1822 = vmatpush.bf16.msra.mxu0 0
    %1823 = vmatpush.bf16.msra.mxu0 0
    %1824 = vmatpush.bf16.msra.mxu0 %v1750
    %1825 = vmatpush.bf16.msra.mxu0 %v1748
    %1826 = vmatpush.bf16.msra.mxu0 %v1746
    %1827 = vmatpush.bf16.msra.mxu0 %v1744
    %1828 = vmatmul.bf16.gmra.mxu0 %v1776
    %v1829 = vpop.f32.mrf.mxu0
    %v1830 = vadd.f32 %v1816, %v1829
    %v1831 = vpop.f32.mrf.mxu0
    %v1832 = vadd.f32 %v1818, %v1831
    %1833 = vdwg.mxu0
    %v1834 = vmax.f32 %v1802, 0.0
    %v1835 = vmax.f32 %v1830, 0.0
    %v1836 = vmax.f32 %v1804, 0.0
    %v1837 = vmax.f32 %v1832, 0.0
    %v1838 = vpack.c.bf16 %v1836, %v1834
    %v1839 = vpack.c.bf16 %v1837, %v1835
    %s1840 = scalar_lea.vmem [#allocation2], 1344
    %v1841 = vld [vmem:[%s1840] sm:$0xff]
    %v1842 = vld [vmem:[%s1840 + $0x8] sm:$0xff]
    %v1843 = vld [vmem:[%s1840 + $0x10] sm:$0xff]
    %v1844 = vld [vmem:[%s1840 + $0x18] sm:$0xff]
    %v1845 = vld [vmem:[%s1840 + $0x20] sm:$0xff]
    %v1846 = vld [vmem:[%s1840 + $0x28] sm:$0xff]
    %v1847 = vld [vmem:[%s1840 + $0x30] sm:$0xff]
    %v1848 = vld [vmem:[%s1840 + $0x38] sm:$0xff]
    %v1849 = vld [vmem:[%s1840 + $0x40] sm:$0xff]
    %v1850 = vld [vmem:[%s1840 + $0x48] sm:$0xff]
    %v1851 = vld [vmem:[%s1840 + $0x50] sm:$0xff]
    %v1852 = vld [vmem:[%s1840 + $0x58] sm:$0xff]
    %v1853 = vld [vmem:[%s1840 + $0x60] sm:$0xff]
    %v1854 = vld [vmem:[%s1840 + $0x68] sm:$0xff]
    %v1855 = vld [vmem:[%s1840 + $0x70] sm:$0xff]
    %v1856 = vld [vmem:[%s1840 + $0x78] sm:$0xff]
    %v1857 = vld [vmem:[%s1840 + $0x80] sm:$0xff]
    %v1858 = vld [vmem:[%s1840 + $0x88] sm:$0xff]
    %v1859 = vld [vmem:[%s1840 + $0x90] sm:$0xff]
    %v1860 = vld [vmem:[%s1840 + $0x98] sm:$0xff]
    %v1861 = vld [vmem:[%s1840 + $0xa0] sm:$0xff]
    %v1862 = vld [vmem:[%s1840 + $0xa8] sm:$0xff]
    %v1863 = vld [vmem:[%s1840 + $0xb0] sm:$0xff]
    %v1864 = vld [vmem:[%s1840 + $0xb8] sm:$0xff]
    %v1865 = vperm.slane %v42, 0
    %v1866 = vperm.slane %v43, 0
    %v1891 = vunpack.c.l.b16 %v1841
    %v1892 = vunpack.c.h.b16 %v1841
    %v1893 = vunpack.c.l.b16 %v1842
    %v1894 = vunpack.c.h.b16 %v1842
    %v1895 = vunpack.c.l.b16 %v1843
    %v1896 = vunpack.c.h.b16 %v1843
    %v1897 = vunpack.c.l.b16 %v1844
    %v1898 = vunpack.c.h.b16 %v1844
    %v1899 = vunpack.c.l.b16 %v1845
    %v1900 = vunpack.c.h.b16 %v1845
    %v1901 = vunpack.c.l.b16 %v1846
    %v1902 = vunpack.c.h.b16 %v1846
    %v1903 = vunpack.c.l.b16 %v1847
    %v1904 = vunpack.c.h.b16 %v1847
    %v1905 = vunpack.c.l.b16 %v1848
    %v1906 = vunpack.c.h.b16 %v1848
    %v1907 = vunpack.c.l.b16 %v1849
    %v1908 = vunpack.c.h.b16 %v1849
    %v1909 = vunpack.c.l.b16 %v1850
    %v1910 = vunpack.c.h.b16 %v1850
    %v1911 = vunpack.c.l.b16 %v1851
    %v1912 = vunpack.c.h.b16 %v1851
    %v1913 = vunpack.c.l.b16 %v1852
    %v1914 = vunpack.c.h.b16 %v1852
    %v1915 = vunpack.c.l.b16 %v1853
    %v1916 = vunpack.c.h.b16 %v1853
    %v1917 = vunpack.c.l.b16 %v1854
    %v1918 = vunpack.c.h.b16 %v1854
    %v1919 = vunpack.c.l.b16 %v1855
    %v1920 = vunpack.c.h.b16 %v1855
    %v1921 = vunpack.c.l.b16 %v1856
    %v1922 = vunpack.c.h.b16 %v1856
    %v1923 = vunpack.c.l.b16 %v1857
    %v1924 = vunpack.c.h.b16 %v1857
    %v1925 = vunpack.c.l.b16 %v1858
    %v1926 = vunpack.c.h.b16 %v1858
    %v1927 = vunpack.c.l.b16 %v1859
    %v1928 = vunpack.c.h.b16 %v1859
    %v1929 = vunpack.c.l.b16 %v1860
    %v1930 = vunpack.c.h.b16 %v1860
    %v1931 = vunpack.c.l.b16 %v1861
    %v1932 = vunpack.c.h.b16 %v1861
    %v1933 = vunpack.c.l.b16 %v1862
    %v1934 = vunpack.c.h.b16 %v1862
    %v1935 = vunpack.c.l.b16 %v1863
    %v1936 = vunpack.c.h.b16 %v1863
    %v1937 = vunpack.c.l.b16 %v1864
    %v1938 = vunpack.c.h.b16 %v1864
    %v1939 = vpack.c.b16 %v1893, %v1891
    %v1940 = vpack.c.b16 %v1894, %v1892
    %v1941 = vpack.c.b16 %v1897, %v1895
    %v1942 = vpack.c.b16 %v1898, %v1896
    %v1943 = vpack.c.b16 %v1901, %v1899
    %v1944 = vpack.c.b16 %v1902, %v1900
    %v1945 = vpack.c.b16 %v1905, %v1903
    %v1946 = vpack.c.b16 %v1906, %v1904
    %v1947 = vpack.c.b16 %v1909, %v1907
    %v1948 = vpack.c.b16 %v1910, %v1908
    %v1949 = vpack.c.b16 %v1913, %v1911
    %v1950 = vpack.c.b16 %v1914, %v1912
    %v1951 = vpack.c.b16 %v1917, %v1915
    %v1952 = vpack.c.b16 %v1918, %v1916
    %v1953 = vpack.c.b16 %v1921, %v1919
    %v1954 = vpack.c.b16 %v1922, %v1920
    %v1955 = vpack.c.b16 %v1925, %v1923
    %v1956 = vpack.c.b16 %v1926, %v1924
    %v1957 = vpack.c.b16 %v1929, %v1927
    %v1958 = vpack.c.b16 %v1930, %v1928
    %v1959 = vpack.c.b16 %v1933, %v1931
    %v1960 = vpack.c.b16 %v1934, %v1932
    %v1961 = vpack.c.b16 %v1937, %v1935
    %v1962 = vpack.c.b16 %v1938, %v1936
    %v1988 = vsel %vm502, %v1839, 0
    %1990 = vmatpush.bf16.msra.mxu0 %v1953
    %1991 = vmatpush.bf16.msra.mxu0 %v1951
    %1992 = vmatpush.bf16.msra.mxu0 %v1949
    %1993 = vmatpush.bf16.msra.mxu0 %v1947
    %1994 = vmatpush.bf16.msra.mxu0 %v1945
    %1995 = vmatpush.bf16.msra.mxu0 %v1943
    %1996 = vmatpush.bf16.msra.mxu0 %v1941
    %1997 = vmatpush.bf16.msra.mxu0 %v1939
    %1998 = vmatmul.bf16.gmra.mxu0 %v1838
    %v1999 = vpop.f32.mrf.mxu0
    %v2000 = vadd.f32 %v1865, %v1999
    %v2001 = vpop.f32.mrf.mxu0
    %v2002 = vadd.f32 %v1865, %v2001
    %2003 = vdwg.mxu0
    %2004 = vmatpush.bf16.msra.mxu0 0
    %2005 = vmatpush.bf16.msra.mxu0 0
    %2006 = vmatpush.bf16.msra.mxu0 0
    %2007 = vmatpush.bf16.msra.mxu0 0
    %2008 = vmatpush.bf16.msra.mxu0 %v1961
    %2009 = vmatpush.bf16.msra.mxu0 %v1959
    %2010 = vmatpush.bf16.msra.mxu0 %v1957
    %2011 = vmatpush.bf16.msra.mxu0 %v1955
    %2012 = vmatmul.bf16.gmra.mxu0 %v1988
    %v2013 = vpop.f32.mrf.mxu0
    %v2014 = vadd.f32 %v2000, %v2013
    %v2015 = vpop.f32.mrf.mxu0
    %v2016 = vadd.f32 %v2002, %v2015
    %2017 = vdwg.mxu0
    %2018 = vmatpush.bf16.msra.mxu0 %v1954
    %2019 = vmatpush.bf16.msra.mxu0 %v1952
    %2020 = vmatpush.bf16.msra.mxu0 %v1950
    %2021 = vmatpush.bf16.msra.mxu0 %v1948
    %2022 = vmatpush.bf16.msra.mxu0 %v1946
    %2023 = vmatpush.bf16.msra.mxu0 %v1944
    %2024 = vmatpush.bf16.msra.mxu0 %v1942
    %2025 = vmatpush.bf16.msra.mxu0 %v1940
    %2026 = vmatmul.bf16.gmra.mxu0 %v1838
    %v2027 = vpop.f32.mrf.mxu0
    %v2028 = vadd.f32 %v1866, %v2027
    %v2029 = vpop.f32.mrf.mxu0
    %v2030 = vadd.f32 %v1866, %v2029
    %2031 = vdwg.mxu0
    %2032 = vmatpush.bf16.msra.mxu0 0
    %2033 = vmatpush.bf16.msra.mxu0 0
    %2034 = vmatpush.bf16.msra.mxu0 0
    %2035 = vmatpush.bf16.msra.mxu0 0
    %2036 = vmatpush.bf16.msra.mxu0 %v1962
    %2037 = vmatpush.bf16.msra.mxu0 %v1960
    %2038 = vmatpush.bf16.msra.mxu0 %v1958
    %2039 = vmatpush.bf16.msra.mxu0 %v1956
    %2040 = vmatmul.bf16.gmra.mxu0 %v1988
    %v2041 = vpop.f32.mrf.mxu0
    %v2042 = vadd.f32 %v2028, %v2041
    %v2043 = vpop.f32.mrf.mxu0
    %v2044 = vadd.f32 %v2030, %v2043
    %2045 = vdwg.mxu0
    %v2046 = vmax.f32 %v2014, 0.0
    %v2047 = vmax.f32 %v2042, 0.0
    %v2048 = vmax.f32 %v2016, 0.0
    %v2049 = vmax.f32 %v2044, 0.0
    %v2050 = vpack.c.bf16 %v2048, %v2046
    %v2051 = vpack.c.bf16 %v2049, %v2047
    %v2052 = vld [vmem:[%s4] sm:$0xf]
    %v2053 = vld [vmem:[%s4 + $0x4] sm:$0xf]
    %v2054 = vld [vmem:[%s4 + $0x8] sm:$0xf]
    %v2055 = vld [vmem:[%s4 + $0xc] sm:$0xf]
    %v2056 = vld [vmem:[%s4 + $0x10] sm:$0xf]
    %v2057 = vld [vmem:[%s4 + $0x14] sm:$0xf]
    %v2058 = vld [vmem:[%s4 + $0x18] sm:$0xf]
    %v2059 = vld [vmem:[%s4 + $0x1c] sm:$0xf]
    %v2060 = vld [vmem:[%s4 + $0x20] sm:$0xf]
    %v2061 = vld [vmem:[%s4 + $0x24] sm:$0xf]
    %v2062 = vld [vmem:[%s4 + $0x28] sm:$0xf]
    %v2063 = vld [vmem:[%s4 + $0x2c] sm:$0xf]
    %v2064 = vld [vmem:[%s4 + $0x30] sm:$0xf]
    %v2065 = vld [vmem:[%s4 + $0x34] sm:$0xf]
    %v2066 = vld [vmem:[%s4 + $0x38] sm:$0xf]
    %v2067 = vld [vmem:[%s4 + $0x3c] sm:$0xf]
    %v2068 = vld [vmem:[%s4 + $0x40] sm:$0xf]
    %v2069 = vld [vmem:[%s4 + $0x44] sm:$0xf]
    %v2070 = vld [vmem:[%s4 + $0x48] sm:$0xf]
    %v2071 = vld [vmem:[%s4 + $0x4c] sm:$0xf]
    %v2072 = vld [vmem:[%s4 + $0x50] sm:$0xf]
    %v2073 = vld [vmem:[%s4 + $0x54] sm:$0xf]
    %v2074 = vld [vmem:[%s4 + $0x58] sm:$0xf]
    %v2075 = vld [vmem:[%s4 + $0x5c] sm:$0xf]
    %v2076 = vperm.slane %v42, 1
    %v2101 = vunpack.c.l.b16 %v2052
    %v2102 = vunpack.c.l.b16 %v2053
    %v2103 = vunpack.c.l.b16 %v2054
    %v2104 = vunpack.c.l.b16 %v2055
    %v2105 = vunpack.c.l.b16 %v2056
    %v2106 = vunpack.c.l.b16 %v2057
    %v2107 = vunpack.c.l.b16 %v2058
    %v2108 = vunpack.c.l.b16 %v2059
    %v2109 = vunpack.c.l.b16 %v2060
    %v2110 = vunpack.c.l.b16 %v2061
    %v2111 = vunpack.c.l.b16 %v2062
    %v2112 = vunpack.c.l.b16 %v2063
    %v2113 = vunpack.c.l.b16 %v2064
    %v2114 = vunpack.c.l.b16 %v2065
    %v2115 = vunpack.c.l.b16 %v2066
    %v2116 = vunpack.c.l.b16 %v2067
    %v2117 = vunpack.c.l.b16 %v2068
    %v2118 = vunpack.c.l.b16 %v2069
    %v2119 = vunpack.c.l.b16 %v2070
    %v2120 = vunpack.c.l.b16 %v2071
    %v2121 = vunpack.c.l.b16 %v2072
    %v2122 = vunpack.c.l.b16 %v2073
    %v2123 = vunpack.c.l.b16 %v2074
    %v2124 = vunpack.c.l.b16 %v2075
    %v2125 = vpack.c.b16 %v2102, %v2101
    %v2126 = vpack.c.b16 %v2104, %v2103
    %v2127 = vpack.c.b16 %v2106, %v2105
    %v2128 = vpack.c.b16 %v2108, %v2107
    %v2129 = vpack.c.b16 %v2110, %v2109
    %v2130 = vpack.c.b16 %v2112, %v2111
    %v2131 = vpack.c.b16 %v2114, %v2113
    %v2132 = vpack.c.b16 %v2116, %v2115
    %v2133 = vpack.c.b16 %v2118, %v2117
    %v2134 = vpack.c.b16 %v2120, %v2119
    %v2135 = vpack.c.b16 %v2122, %v2121
    %v2136 = vpack.c.b16 %v2124, %v2123
    %v2150 = vsel %vm502, %v2051, 0
    %2152 = vmatpush.bf16.msra.mxu0 %v2132
    %2153 = vmatpush.bf16.msra.mxu0 %v2131
    %2154 = vmatpush.bf16.msra.mxu0 %v2130
    %2155 = vmatpush.bf16.msra.mxu0 %v2129
    %2156 = vmatpush.bf16.msra.mxu0 %v2128
    %2157 = vmatpush.bf16.msra.mxu0 %v2127
    %2158 = vmatpush.bf16.msra.mxu0 %v2126
    %2159 = vmatpush.bf16.msra.mxu0 %v2125
    %2160 = vmatmul.bf16.gmra.mxu0 %v2050
    %v2161 = vpop.f32.mrf.mxu0
    %v2162 = vadd.f32 %v2076, %v2161
    %v2163 = vpop.f32.mrf.mxu0
    %v2164 = vadd.f32 %v2076, %v2163
    %2165 = vdwg.mxu0
    %2166 = vmatpush.bf16.msra.mxu0 0
    %2167 = vmatpush.bf16.msra.mxu0 0
    %2168 = vmatpush.bf16.msra.mxu0 0
    %2169 = vmatpush.bf16.msra.mxu0 0
    %2170 = vmatpush.bf16.msra.mxu0 %v2136
    %2171 = vmatpush.bf16.msra.mxu0 %v2135
    %2172 = vmatpush.bf16.msra.mxu0 %v2134
    %2173 = vmatpush.bf16.msra.mxu0 %v2133
    %2174 = vmatmul.bf16.gmra.mxu0 %v2150
    %v2175 = vpop.f32.mrf.mxu0
    %v2176 = vadd.f32 %v2162, %v2175
    %v2177 = vpop.f32.mrf.mxu0
    %v2178 = vadd.f32 %v2164, %v2177
    %2179 = vdwg.mxu0
    %2180 = vst [vmem:[%s6] sm:$0xff] %v2176
    %2181 = vst [vmem:[%s6 + $0x8] sm:$0xff] %v2178
    // Predicated region
    $region30: #{mlp_forward.1} parent=1 // pred_check
      _
    $region31: #{mlp_forward.1} parent=1 // pred_check_branch
      %2183 = sbr.rel (0) target = $region33
    $region32: #{mlp_forward.1} parent=1 // pred_region
      _
    $region33: #{mlp_forward.1} parent=1 // pred_fallthru
      _
    // Predicated region
    $region34: #{mlp_forward.1} parent=1 // pred_check
      _
    $region35: #{mlp_forward.1} parent=1 // pred_check_branch
      %2185 = sbr.rel (0) target = $region37
    $region36: #{mlp_forward.1} parent=1 // pred_region
      _
    $region37: #{mlp_forward.1} parent=1 // pred_fallthru
      _
    %2186 = vsyncpa [#allocation3], 1

</llo_original>
